<compile_context>
chip_gen: v7x
topology: tpu7x:2x2x1
jax: 0.10.0
libtpu: 0.0.40
codegen_flags: <defaults>
</compile_context>

<pallas_src>
import jax
import jax.numpy as jnp
from jax import lax
from jax.experimental import pallas as pl
from jax.experimental.pallas import tpu as pltpu

R_MAX = 128                   # max number of connected components represented
LAB_BITS = 8
LABEL_STRIDE = 1 << LAB_BITS  # 256
LANE = 128

TQ = 256                      # query tile (sublane axis of the (TQ,TK) scan tile)
TK = 512                      # in-kernel key chunk (lane axis); TK % 128 == 0

BIG_KEY = 1.0e9               # padding-key sentinel; can never win the min
BIG_INIT = float(1 << 30)     # scratch init; int32 cast & 255 == 0 -> background


# ----------------------------------------------------------------------------
# Pallas kernel: per (batch, query-tile) nearest-foreground-region assignment
# (streamed over compacted key chunks) + per-region masked sums.
# ----------------------------------------------------------------------------
def region_dice_kernel(nkt_ref, pred_ref, gt_ref, cq_ref, ckc_ref, ckb_ref,
                       out_ref, best_ref):
    b = pl.program_id(0)
    tq = cq_ref.shape[0]
    n_kt = nkt_ref[b]                                   # foreground key chunks

    best_ref[...] = jnp.full(best_ref.shape, BIG_INIT, dtype=best_ref.dtype)

    @pl.loop(0, n_kt)
    def _scan(s):
        off = pl.multiple_of(s * TK, TK)
        ck_blk = ckc_ref[0, :, pl.ds(off, TK)]          # (8, TK)  32*coords (+0 pad)
        kb_blk = ckb_ref[0, :, pl.ds(off, TK)]          # (1, TK)  256*|k|^2 + label
        # MXU cross term: (16*q) . (32*k) = 512 * q.k
        dot2 = jnp.dot(cq_ref[...], ck_blk,
                       preferred_element_type=jnp.float32)       # (TQ, TK)
        # Lexicographic key = 256*(|k|^2 - 2 q.k) + label  (exact f32 integers;
        # the per-row-constant 256*|q|^2 is dropped - it changes neither the
        # argmin nor the low-8-bit label decode).
        key = kb_blk - dot2                                       # (TQ, TK)
        m = best_ref[...]                                         # (TQ, 128)
        for j in range(TK // LANE):                               # per-lane-block VPU mins
            m = jnp.minimum(m, key[:, j * LANE:(j + 1) * LANE])
        best_ref[...] = m

    # Finalize: one XLU cross-lane reduce, label decode, onehot, region sums.
    best = jnp.min(best_ref[...], axis=-1, keepdims=True)         # (TQ, 1)
    region = best.astype(jnp.int32) & (LABEL_STRIDE - 1)           # (TQ, 1)
    lane_lab = lax.broadcasted_iota(jnp.int32, (tq, R_MAX), 1) + 1
    onehot = (region == lane_lab).astype(jnp.float32)              # (TQ, R_MAX)
    pred = jax.nn.sigmoid(pred_ref[0])                             # (1, TQ)
    gt = gt_ref[0]                                                 # (1, TQ)
    lhs = jnp.concatenate([pred * gt, pred, gt], axis=0)           # (3, TQ)
    out_ref[0, 0] = jnp.dot(lhs, onehot,
                            preferred_element_type=jnp.float32)    # (3, R_MAX)


# ----------------------------------------------------------------------------
# Plain-JAX connected components (26-connectivity) via min-label propagation.
# ----------------------------------------------------------------------------
_BIG_LABEL = 1 << 30


def _min_pool_cheb(x):
    """Separable 3x3x3 (Chebyshev) min filter on a 3-D int32 volume."""
    for axis in range(3):
        n = x.shape[axis]
        pad = [(1, 1) if a == axis else (0, 0) for a in range(3)]
        xp = jnp.pad(x, pad, constant_values=_BIG_LABEL)
        x = jnp.minimum(
            jnp.minimum(lax.slice_in_dim(xp, 0, n, axis=axis),
                        lax.slice_in_dim(xp, 1, n + 1, axis=axis)),
            lax.slice_in_dim(xp, 2, n + 2, axis=axis))
    return x


def connected_components_3d(mask3d):
    """mask3d: bool (D,H,W) -> (compact labels flat (V,) int32, num_features)."""
    D, H, W = mask3d.shape
    V = D * H * W
    idx = jnp.arange(V, dtype=jnp.int32).reshape(D, H, W) + 1
    init = jnp.where(mask3d, idx, _BIG_LABEL)

    def step(cur):
        return jnp.where(mask3d, jnp.minimum(cur, _min_pool_cheb(cur)),
                         _BIG_LABEL)

    def cond(state):
        prev, cur = state
        return jnp.any(prev != cur)

    def body(state):
        _, cur = state
        return cur, step(cur)

    _, labels = lax.while_loop(cond, body, (init, step(init)))
    labels = jnp.where(mask3d, labels, 0)

    flat_lab = labels.reshape(-1)
    flat_mask = mask3d.reshape(-1)
    # Compact labels in raster-scan first-occurrence order (skimage numbering).
    is_seed = flat_mask & (flat_lab == (jnp.arange(V, dtype=jnp.int32) + 1))
    ranks = jnp.cumsum(is_seed.astype(jnp.int32))
    num_features = ranks[-1]
    compact = jnp.where(
        flat_mask, jnp.take(ranks, jnp.clip(flat_lab - 1, 0, V - 1)), 0
    ).astype(jnp.int32)
    return compact, num_features


def _round_up(a, b):
    return -(-a // b) * b


# ----------------------------------------------------------------------------
# Wrapper: forward pass of RegionDiceLoss.
# ----------------------------------------------------------------------------
@jax.jit
def region_dice_loss(pred, target):
    B, C, D, H, W = pred.shape
    assert C == 1, "module squeezes the channel dim; expects C == 1"
    V = D * H * W
    max_dim = max(D, H, W)
    # Exactness of the packed f32 key (256*d2 + label) incl. the MXU cross
    # term with pre-scaled coords: all intermediates must stay below 2^24.
    assert 512 * 3 * (max_dim - 1) ** 2 + LABEL_STRIDE <= (1 << 24), (
        "volume too large for exact pre-scaled f32 distance keys "
        "(max spatial dim <= 105)")

    mask = target.reshape(B, D, H, W) != 0
    labs, nf = jax.vmap(connected_components_3d)(mask)        # (B,V), (B,)
    # Clamp labels beyond R_MAX to background so they cannot corrupt / alias
    # the 8-bit label field of the packed key.
    labs = jnp.where(labs <= R_MAX, labs, 0)

    # ---- query side: every voxel, padded to a TQ multiple -------------------
    Vq = _round_up(V, TQ)
    NQ = Vq // TQ
    pad_q = Vq - V
    # Pad pred with -1e9 so sigmoid(pad) == 0 -> padded voxels contribute 0.
    pred_q = jnp.pad(pred.reshape(B, 1, V).astype(jnp.float32),
                     ((0, 0), (0, 0), (0, pad_q)), constant_values=-1e9)
    gt_q = jnp.pad(target.reshape(B, 1, V).astype(jnp.float32),
                   ((0, 0), (0, 0), (0, pad_q)))

    idx = jnp.arange(V, dtype=jnp.int32)
    z = idx // (H * W)
    y = (idx - z * (H * W)) // W
    x = idx - z * (H * W) - y * W
    coords = jnp.stack([z, y, x], axis=-1)                     # (V, 3) int32

    # Query coords scaled by 16, zero-padded to an 8-wide contraction dim.
    cq = jnp.zeros((Vq, 8), jnp.float32)
    cq = cq.at[:V, :3].set(coords.astype(jnp.float32) * 16.0)

    # ---- key side: compacted foreground voxels -------------------------------
    NFG_PAD = _round_up(V, TK)        # worst case: every voxel is foreground

    def compact_keys(lab_flat):
        fg = lab_flat > 0
        n_fg = jnp.sum(fg, dtype=jnp.int32)
        order = jnp.argsort(jnp.where(fg, 0, 1), stable=True)   # fg first, raster order
        order = jnp.pad(order, (0, NFG_PAD - V))
        valid = jnp.arange(NFG_PAD, dtype=jnp.int32) < n_fg
        zyx = coords[order]                                     # (NFG_PAD, 3) int32
        lab_s = lab_flat[order]
        # Key coords scaled by 32 (carries the factor 2 of -2 q.k), 8 rows.
        ckc = jnp.zeros((8, NFG_PAD), jnp.float32)
        ckc = ckc.at[:3, :].set(
            jnp.where(valid[None, :], zyx.T.astype(jnp.float32) * 32.0, 0.0))
        # Key bias = 256*|k|^2 + label (exact int32), BIG for padding slots.
        kb_i = jnp.sum(zyx * zyx, axis=-1) * LABEL_STRIDE + lab_s
        ckb = jnp.where(valid, kb_i.astype(jnp.float32), BIG_KEY)[None, :]
        n_kt = (n_fg + TK - 1) // TK
        return ckc, ckb, n_kt

    ckc, ckb, n_kt = jax.vmap(compact_keys)(labs)   # (B,8,P), (B,1,P), (B,)
    n_kt = n_kt.astype(jnp.int32)

    sums = pl.pallas_call(
        region_dice_kernel,
        out_shape=jax.ShapeDtypeStruct((B, NQ, 3, R_MAX), jnp.float32),
        grid_spec=pltpu.PrefetchScalarGridSpec(
            num_scalar_prefetch=1,
            grid=(B, NQ),
            in_specs=[
                pl.BlockSpec((1, 1, TQ), lambda b, qi, nkt: (b, 0, qi)),      # pred
                pl.BlockSpec((1, 1, TQ), lambda b, qi, nkt: (b, 0, qi)),      # gt
                pl.BlockSpec((TQ, 8), lambda b, qi, nkt: (qi, 0)),            # q coords
                pl.BlockSpec((1, 8, NFG_PAD), lambda b, qi, nkt: (b, 0, 0)),  # k coords
                pl.BlockSpec((1, 1, NFG_PAD), lambda b, qi, nkt: (b, 0, 0)),  # k bias
            ],
            out_specs=pl.BlockSpec((1, 1, 3, R_MAX),
                                   lambda b, qi, nkt: (b, qi, 0, 0)),
            scratch_shapes=[pltpu.VMEM((TQ, LANE), jnp.float32)],
        ),
        compiler_params=pltpu.CompilerParams(
            dimension_semantics=("parallel", "parallel"),
        ),
    )(n_kt, pred_q, gt_q, cq, ckc, ckb)

    sums = sums.sum(axis=1)                    # (B, 3, R_MAX) over query tiles
    inter = sums[:, 0, :]                      # sum(pred*gt) per Voronoi region
    psum = sums[:, 1, :]                       # sum(pred)    per Voronoi region
    gsum = sums[:, 2, :]                       # sum(gt)      per Voronoi region

    dice = 2.0 * inter / (psum + gsum + 1e-8)
    r_idx = jnp.arange(1, R_MAX + 1, dtype=jnp.int32)
    valid_r = (r_idx[None, :] <= nf[:, None]).astype(jnp.float32)
    mean_dice = (jnp.sum(dice * valid_r, axis=1)
                 / jnp.maximum(nf, 1).astype(jnp.float32))
    loss_b = jnp.where(nf == 0, 1.0, 1.0 - mean_dice)
    return jnp.mean(loss_b)


if __name__ == "__main__":
    key = jax.random.PRNGKey(0)
    B, C, D, H, W = 2, 1, 8, 8, 8

    pred = jax.random.normal(key, (B, C, D, H, W), dtype=jnp.float32)

    target = jnp.zeros((B, C, D, H, W), dtype=jnp.float32)
    # batch 0: two separated blobs -> two connected components
    target = target.at[0, 0, 1:3, 1:3, 1:3].set(1.0)
    target = target.at[0, 0, 5:7, 5:7, 5:7].set(1.0)
    # batch 1: a single blob -> one connected component
    target = target.at[1, 0, 2:5, 2:5, 3:6].set(1.0)

    loss = region_dice_loss(pred, target)
    jax.block_until_ready(loss)
    print("KERNEL_OK")
</pallas_src>

<mosaic_0001>
module attributes {stable_mosaic.version = 11 : i64} {
  func.func @region_dice_kernel(%arg0: i32, %arg1: i32, %arg2: memref<2xi32, #tpu.memory_space<smem>>, %arg3: memref<1x1x256xf32, #tpu.memory_space<vmem>>, %arg4: memref<1x1x256xf32, #tpu.memory_space<vmem>>, %arg5: memref<256x8xf32, #tpu.memory_space<vmem>>, %arg6: memref<1x8x512xf32, #tpu.memory_space<vmem>>, %arg7: memref<1x1x512xf32, #tpu.memory_space<vmem>>, %arg8: memref<1x1x3x128xf32, #tpu.memory_space<vmem>>, %arg9: memref<256x128xf32, #tpu.memory_space<vmem>>) attributes {dimension_semantics = [#tpu.dimension_semantics<parallel>, #tpu.dimension_semantics<parallel>], iteration_bounds = array<i64: 2, 2>, scalar_prefetch = 1 : i64, scratch_operands = 1 : i64, tpu.core_type = #tpu.core_type<tc>, window_params = [{transform_indices = @transform_0, window_bounds = array<i64: 1, 1, 256>}, {transform_indices = @transform_1, window_bounds = array<i64: 1, 1, 256>}, {transform_indices = @transform_2, window_bounds = array<i64: 256, 8>}, {transform_indices = @transform_3, window_bounds = array<i64: 1, 8, 512>}, {transform_indices = @transform_4, window_bounds = array<i64: 1, 1, 512>}, {transform_indices = @transform_5, window_bounds = array<i64: 1, 1, 3, 128>}]} {
    %0 = arith.index_cast %arg0 : i32 to index
    %1 = memref.load %arg2[%0] : memref<2xi32, #tpu.memory_space<smem>>
    %cst = arith.constant 1.07374182E+9 : f32
    %2 = vector.broadcast %cst : f32 to vector<256x128xf32>
    %c0 = arith.constant 0 : index
    %c0_0 = arith.constant 0 : index
    %3 = vector.load %arg9[%c0, %c0_0] : memref<256x128xf32, #tpu.memory_space<vmem>>, vector<256x128xf32>
    tpu.vector_store %arg9[%c0, %c0_0], %2 {strides = array<i32>} : memref<256x128xf32, #tpu.memory_space<vmem>>, vector<256x128xf32>,
    %c0_i32 = arith.constant 0 : i32
    %4 = arith.subi %1, %c0_i32 : i32
    %c1_i32 = arith.constant 1 : i32
    %c1_i32_1 = arith.constant 1 : i32
    %5 = arith.subi %c1_i32, %c1_i32_1 : i32
    %6 = arith.addi %4, %5 : i32
    %c1_i32_2 = arith.constant 1 : i32
    %7 = arith.divsi %6, %c1_i32_2 : i32
    %c1_i32_3 = arith.constant 1 : i32
    %c0_i32_4 = arith.constant 0 : i32
    %c0_i32_5 = arith.constant 0 : i32
    %8 = arith.subi %7, %c0_i32_5 : i32
    %9 = arith.addi %c0_i32_5, %8 : i32
    %c1_i32_6 = arith.constant 1 : i32
    scf.for %arg10 = %c0_i32_5 to %9 step %c1_i32_6  : i32 {
      %38 = arith.muli %arg10, %c1_i32_3 : i32
      %39 = arith.addi %c0_i32_4, %38 : i32
      %c512_i32 = arith.constant 512 : i32
      %40 = arith.muli %39, %c512_i32 : i32
      %41 = tpu.assume_multiple %40, 512 : i32
      %c0_23 = arith.constant 0 : index
      %c0_24 = arith.constant 0 : index
      %42 = arith.index_cast %41 : i32 to index
      %43 = vector.load %arg6[%c0_23, %c0_24, %42] : memref<1x8x512xf32, #tpu.memory_space<vmem>>, vector<1x8x512xf32>
      %44 = vector.shape_cast %43 : vector<1x8x512xf32> to vector<8x512xf32>
      %c0_25 = arith.constant 0 : index
      %c0_26 = arith.constant 0 : index
      %45 = arith.index_cast %41 : i32 to index
      %46 = vector.load %arg7[%c0_25, %c0_26, %45] : memref<1x1x512xf32, #tpu.memory_space<vmem>>, vector<1x1x512xf32>
      %47 = vector.shape_cast %46 : vector<1x1x512xf32> to vector<1x512xf32>
      %c0_27 = arith.constant 0 : index
      %c0_28 = arith.constant 0 : index
      %48 = vector.load %arg5[%c0_27, %c0_28] : memref<256x8xf32, #tpu.memory_space<vmem>>, vector<256x8xf32>
      %cst_29 = arith.constant dense<0.000000e+00> : vector<256x512xf32>
      %49 = tpu.matmul %48, %44, %cst_29 {dimension_numbers = #tpu.dot_dimension_numbers<[1], [0], [0], [1], [0, 0, 1, 1], [], []>} : vector<256x8xf32>, vector<8x512xf32>, vector<256x512xf32> -> vector<256x512xf32>
      %50 = vector.broadcast %47 : vector<1x512xf32> to vector<256x512xf32>
      %51 = arith.subf %50, %49 : vector<256x512xf32>
      %c0_30 = arith.constant 0 : index
      %c0_31 = arith.constant 0 : index
      %52 = vector.load %arg9[%c0_30, %c0_31] : memref<256x128xf32, #tpu.memory_space<vmem>>, vector<256x128xf32>
      %53 = vector.extract_strided_slice %51 {offsets = [0, 0], sizes = [256, 128], strides = [1, 1]} : vector<256x512xf32> to vector<256x128xf32>
      %54 = arith.minimumf %52, %53 : vector<256x128xf32>
      %55 = vector.extract_strided_slice %51 {offsets = [0, 128], sizes = [256, 128], strides = [1, 1]} : vector<256x512xf32> to vector<256x128xf32>
      %56 = arith.minimumf %54, %55 : vector<256x128xf32>
      %57 = vector.extract_strided_slice %51 {offsets = [0, 256], sizes = [256, 128], strides = [1, 1]} : vector<256x512xf32> to vector<256x128xf32>
      %58 = arith.minimumf %56, %57 : vector<256x128xf32>
      %59 = vector.extract_strided_slice %51 {offsets = [0, 384], sizes = [256, 128], strides = [1, 1]} : vector<256x512xf32> to vector<256x128xf32>
      %60 = arith.minimumf %58, %59 : vector<256x128xf32>
      %c0_32 = arith.constant 0 : index
      %c0_33 = arith.constant 0 : index
      %61 = vector.load %arg9[%c0_32, %c0_33] : memref<256x128xf32, #tpu.memory_space<vmem>>, vector<256x128xf32>
      tpu.vector_store %arg9[%c0_32, %c0_33], %60 {strides = array<i32>} : memref<256x128xf32, #tpu.memory_space<vmem>>, vector<256x128xf32>,
    }
    %c0_7 = arith.constant 0 : index
    %c0_8 = arith.constant 0 : index
    %10 = vector.load %arg9[%c0_7, %c0_8] : memref<256x128xf32, #tpu.memory_space<vmem>>, vector<256x128xf32>
    %cst_9 = arith.constant dense<0x7F800000> : vector<256xf32>
    %11 = vector.multi_reduction <minimumf>, %10, %cst_9 [1] : vector<256x128xf32> to vector<256xf32>
    %12 = vector.shape_cast %11 : vector<256xf32> to vector<256x1xf32>
    %13 = arith.fptosi %12 : vector<256x1xf32> to vector<256x1xi32>
    %c255_i32 = arith.constant 255 : i32
    %14 = vector.broadcast %c255_i32 : i32 to vector<256x1xi32>
    %15 = arith.andi %13, %14 : vector<256x1xi32>
    %16 = tpu.iota {dimensions = array<i32: 1>} : vector<256x128xi32>
    %c1_i32_10 = arith.constant 1 : i32
    %17 = vector.broadcast %c1_i32_10 : i32 to vector<256x128xi32>
    %18 = arith.addi %16, %17 : vector<256x128xi32>
    %19 = vector.broadcast %15 : vector<256x1xi32> to vector<256x128xi32>
    %20 = arith.cmpi eq, %19, %18 : vector<256x128xi32>
    %21 = arith.extui %20 : vector<256x128xi1> to vector<256x128xi32>
    %22 = arith.sitofp %21 : vector<256x128xi32> to vector<256x128xf32>
    %c0_11 = arith.constant 0 : index
    %c0_12 = arith.constant 0 : index
    %c0_13 = arith.constant 0 : index
    %23 = vector.load %arg3[%c0_11, %c0_12, %c0_13] : memref<1x1x256xf32, #tpu.memory_space<vmem>>, vector<1x1x256xf32>
    %24 = vector.shape_cast %23 : vector<1x1x256xf32> to vector<1x256xf32>
    %25 = arith.negf %24 : vector<1x256xf32>
    %26 = math.exp %25 : vector<1x256xf32>
    %cst_14 = arith.constant 1.000000e+00 : f32
    %27 = vector.broadcast %cst_14 : f32 to vector<1x256xf32>
    %28 = arith.addf %27, %26 : vector<1x256xf32>
    %29 = arith.divf %27, %28 : vector<1x256xf32>
    %c0_15 = arith.constant 0 : index
    %c0_16 = arith.constant 0 : index
    %c0_17 = arith.constant 0 : index
    %30 = vector.load %arg4[%c0_15, %c0_16, %c0_17] : memref<1x1x256xf32, #tpu.memory_space<vmem>>, vector<1x1x256xf32>
    %31 = vector.shape_cast %30 : vector<1x1x256xf32> to vector<1x256xf32>
    %32 = arith.mulf %29, %31 : vector<1x256xf32>
    %33 = tpu.concatenate %32, %29, %31 in 0 : vector<1x256xf32>, vector<1x256xf32>, vector<1x256xf32> -> vector<3x256xf32>
    %cst_18 = arith.constant dense<0.000000e+00> : vector<3x128xf32>
    %34 = tpu.matmul %33, %22, %cst_18 {dimension_numbers = #tpu.dot_dimension_numbers<[1], [0], [0], [1], [0, 0, 1, 1], [], []>} : vector<3x256xf32>, vector<256x128xf32>, vector<3x128xf32> -> vector<3x128xf32>
    %c0_19 = arith.constant 0 : index
    %c0_20 = arith.constant 0 : index
    %c0_21 = arith.constant 0 : index
    %c0_22 = arith.constant 0 : index
    %35 = vector.load %arg8[%c0_19, %c0_20, %c0_21, %c0_22] : memref<1x1x3x128xf32, #tpu.memory_space<vmem>>, vector<1x1x3x128xf32>
    %36 = vector.shape_cast %35 : vector<1x1x3x128xf32> to vector<3x128xf32>
    %37 = vector.shape_cast %34 : vector<3x128xf32> to vector<1x1x3x128xf32>
    tpu.vector_store %arg8[%c0_19, %c0_20, %c0_21, %c0_22], %37 {strides = array<i32>} : memref<1x1x3x128xf32, #tpu.memory_space<vmem>>, vector<1x1x3x128xf32>,
    return
  }
  func.func @transform_0(%arg0: i32, %arg1: i32, %arg2: memref<2xi32, #tpu.memory_space<smem>>) -> (i32, i32, i32) {
    %c0_i32 = arith.constant 0 : i32
    %c0_i32_0 = arith.constant 0 : i32
    return %arg0, %c0_i32, %arg1 : i32, i32, i32
  }
  func.func @transform_1(%arg0: i32, %arg1: i32, %arg2: memref<2xi32, #tpu.memory_space<smem>>) -> (i32, i32, i32) {
    %c0_i32 = arith.constant 0 : i32
    %c0_i32_0 = arith.constant 0 : i32
    return %arg0, %c0_i32, %arg1 : i32, i32, i32
  }
  func.func @transform_2(%arg0: i32, %arg1: i32, %arg2: memref<2xi32, #tpu.memory_space<smem>>) -> (i32, i32) {
    %c0_i32 = arith.constant 0 : i32
    %c0_i32_0 = arith.constant 0 : i32
    return %arg1, %c0_i32 : i32, i32
  }
  func.func @transform_3(%arg0: i32, %arg1: i32, %arg2: memref<2xi32, #tpu.memory_space<smem>>) -> (i32, i32, i32) {
    %c0_i32 = arith.constant 0 : i32
    %c0_i32_0 = arith.constant 0 : i32
    %c0_i32_1 = arith.constant 0 : i32
    return %arg0, %c0_i32, %c0_i32_0 : i32, i32, i32
  }
  func.func @transform_4(%arg0: i32, %arg1: i32, %arg2: memref<2xi32, #tpu.memory_space<smem>>) -> (i32, i32, i32) {
    %c0_i32 = arith.constant 0 : i32
    %c0_i32_0 = arith.constant 0 : i32
    %c0_i32_1 = arith.constant 0 : i32
    return %arg0, %c0_i32, %c0_i32_0 : i32, i32, i32
  }
  func.func @transform_5(%arg0: i32, %arg1: i32, %arg2: memref<2xi32, #tpu.memory_space<smem>>) -> (i32, i32, i32, i32) {
    %c0_i32 = arith.constant 0 : i32
    %c0_i32_0 = arith.constant 0 : i32
    %c0_i32_1 = arith.constant 0 : i32
    return %arg0, %arg1, %c0_i32, %c0_i32_0 : i32, i32, i32, i32
  }
}

</mosaic_0001>

<llo_original>
// kernel: region_dice_loss.1
$region0: #{region_dice_loss.1}
  #allocation0 [shape = 'u32[]', space=smem, size = 0x4, offset = 0x4, fixed_abs, tag = 'smem constant byte address 0x4 - core index']
  #allocation1 [shape = 'u32[144,128]{1,0:T(1,128)}', space=vmem, size = 0x12000, scoped, tag = 'internal scratch']
  #allocation2 [shape = 'f32[256,128]{1,0:T(8,128)}', space=vmem, size = 0x20000, scoped, tag = 'scratch operand']
  #allocation3 [shape = 's32[1]{0}', space=sflag, size = 0x4, scoped, tag = 'scoped memory for region_dice_loss.1']
  #allocation4 [shape = 'u8[512]{0}', space=smem, size = 0x200, scoped, tag = 'prefetched SMEM operand 0']
  %s0 = inlined_call_operand.vmem [shape: s32[2], index: 0, kind: input, shape index: {}]
  %s1 = inlined_call_operand.vmem [shape: f32[2,1,512], index: 1, kind: input, shape index: {}]
  %s2 = inlined_call_operand.vmem [shape: f32[2,1,512], index: 2, kind: input, shape index: {}]
  %s3 = inlined_call_operand.vmem [shape: f32[512,8], index: 3, kind: input, shape index: {}]
  %s4 = inlined_call_operand.vmem [shape: f32[2,8,512], index: 4, kind: input, shape index: {}]
  %s5 = inlined_call_operand.vmem [shape: f32[2,1,512], index: 5, kind: input, shape index: {}]
  %s6 = inlined_call_operand.vmem [shape: f32[2,2,3,128], index: 6, kind: output, shape index: {}]
  %s7 = sld [smem:[#allocation0]]
  $region60: #{region_dice_loss.1} parent=0
    _
  %s9 = ssub.s32 1, %s7
  %s10 = scalar_select 0, %s9, %s7
  %s11 = sshll.u32 %s0, 4
  %s12 = int_to_ptr.vmem [resolvable:$true] %s11
  %14 = dma.vmem_to_smem %s12, 16, [#allocation4], [#allocation3]
  %15 = dma.done [#allocation3], 16
  %16 = sfence
  loop: start=0, step=1, limit=6
  $region2: #{region_dice_loss.1} parent=0 // loop_pre_header
    _
  $region3: #{region_dice_loss.1} parent=0 // loop_header
    %s18 = sphi 0, %s22
    %p19 = scmp.ge.s32.totalorder %s18, 6
    %s25 = sphi 0, %s37
    %s26 = sphi 0, %s33
    %s27 = sphi 0, %s25
    %s28 = sphi 0, %s26
    %s29 = sphi 0, %s27
    %s30 = sphi 0, %s28
    %s42 = sphi 0, %s44
    %s45 = sphi 0, %s42
    %s46 = sphi 0, %s45
    %s62 = sphi 0, %s46
    %s70 = sphi 0, %s72
    %s73 = sphi 0, %s70
    %s74 = sphi 0, %s73
    %s90 = sphi 0, %s74
    %s96 = sphi 0, %s98
    %s99 = sphi 0, %s96
    %s100 = sphi 0, %s99
    %s116 = sphi 0, %s100
    %s122 = sphi 0, %s124
    %s125 = sphi 0, %s122
    %s126 = sphi 0, %s125
    %s142 = sphi 0, %s126
    %s148 = sphi 0, %s150
    %s151 = sphi 0, %s148
    %s152 = sphi 0, %s151
    %s168 = sphi 0, %s152
    %s176 = sphi 0, %s178
    %s179 = sphi 0, %s176
    %s180 = sphi 0, %s179
    %s196 = sphi 0, %s180
  $region4: #{region_dice_loss.1} parent=0 // loop_header_branch
    %21 = sbr.rel (%p19) target = $region8
  $region5: #{region_dice_loss.1} parent=0 // loop_body
    %s23 = ssub.s32 %s18, 1
    %s24 = ssub.s32 %s18, 2
    %s31 = sadd.s32 1, %s26
    %p32 = scmp.ge.s32.totalorder %s31, 2
    %s33 = scalar_select %p32, 0, %s31
    %s34 = sadd.s32 1, %s25
    %s35 = scalar_select %p32, %s34, %s25
    %p36 = scmp.ge.s32.totalorder %s35, 2
    %s37 = scalar_select %p36, 0, %s35
    %s38 = ssub.s32 %s25, %s37
    %s39 = ssub.s32 %s26, %s33
    %s40 = sor.u32 %s38, %s39
    %p41 = scmp.eq.s32.totalorder %s40, 0
    %s43 = sadd.s32 %s42, 1
    %s44 = scalar_select %p41, %s42, %s43
    %p47 = pneg %p41
    %p48 = scmp.eq.s32.totalorder %s18, 3
    %p49 = por %p47, %p48
    %p50 = scmp.ne.s32.totalorder %s42, %s45
    %p51 = scmp.eq.s32.totalorder %s18, 0
    %p52 = por %p50, %p51
    %p53 = scmp.ne.s32.totalorder %s42, %s45
    %p54 = scmp.eq.s32.totalorder %s23, 3
    %p55 = por %p53, %p54
    %p56 = scmp.ne.s32.totalorder %s45, %s46
    %p57 = scmp.eq.s32.totalorder %s23, 0
    %p58 = por %p56, %p57
    %p59 = scmp.ne.s32.totalorder %s45, %s46
    %p60 = scmp.eq.s32.totalorder %s24, 3
    %p61 = por %p59, %p60
    %p63 = scmp.ne.s32.totalorder %s46, %s62
    %p64 = scmp.eq.s32.totalorder %s24, 0
    %p65 = por %p63, %p64
    %s66 = ssub.s32 %s25, %s37
    %s67 = ssub.s32 %s26, %s33
    %s68 = sor.u32 %s66, %s67
    %p69 = scmp.eq.s32.totalorder %s68, 0
    %s71 = sadd.s32 %s70, 1
    %s72 = scalar_select %p69, %s70, %s71
    %p75 = pneg %p69
    %p76 = scmp.eq.s32.totalorder %s18, 3
    %p77 = por %p75, %p76
    %p78 = scmp.ne.s32.totalorder %s70, %s73
    %p79 = scmp.eq.s32.totalorder %s18, 0
    %p80 = por %p78, %p79
    %p81 = scmp.ne.s32.totalorder %s70, %s73
    %p82 = scmp.eq.s32.totalorder %s23, 3
    %p83 = por %p81, %p82
    %p84 = scmp.ne.s32.totalorder %s73, %s74
    %p85 = scmp.eq.s32.totalorder %s23, 0
    %p86 = por %p84, %p85
    %p87 = scmp.ne.s32.totalorder %s73, %s74
    %p88 = scmp.eq.s32.totalorder %s24, 3
    %p89 = por %p87, %p88
    %p91 = scmp.ne.s32.totalorder %s74, %s90
    %p92 = scmp.eq.s32.totalorder %s24, 0
    %p93 = por %p91, %p92
    %s94 = ssub.s32 %s26, %s33
    %p95 = scmp.eq.s32.totalorder %s94, 0
    %s97 = sadd.s32 %s96, 1
    %s98 = scalar_select %p95, %s96, %s97
    %p101 = pneg %p95
    %p102 = scmp.eq.s32.totalorder %s18, 3
    %p103 = por %p101, %p102
    %p104 = scmp.ne.s32.totalorder %s96, %s99
    %p105 = scmp.eq.s32.totalorder %s18, 0
    %p106 = por %p104, %p105
    %p107 = scmp.ne.s32.totalorder %s96, %s99
    %p108 = scmp.eq.s32.totalorder %s23, 3
    %p109 = por %p107, %p108
    %p110 = scmp.ne.s32.totalorder %s99, %s100
    %p111 = scmp.eq.s32.totalorder %s23, 0
    %p112 = por %p110, %p111
    %p113 = scmp.ne.s32.totalorder %s99, %s100
    %p114 = scmp.eq.s32.totalorder %s24, 3
    %p115 = por %p113, %p114
    %p117 = scmp.ne.s32.totalorder %s100, %s116
    %p118 = scmp.eq.s32.totalorder %s24, 0
    %p119 = por %p117, %p118
    %s120 = ssub.s32 %s25, %s37
    %p121 = scmp.eq.s32.totalorder %s120, 0
    %s123 = sadd.s32 %s122, 1
    %s124 = scalar_select %p121, %s122, %s123
    %p127 = pneg %p121
    %p128 = scmp.eq.s32.totalorder %s18, 3
    %p129 = por %p127, %p128
    %p130 = scmp.ne.s32.totalorder %s122, %s125
    %p131 = scmp.eq.s32.totalorder %s18, 0
    %p132 = por %p130, %p131
    %p133 = scmp.ne.s32.totalorder %s122, %s125
    %p134 = scmp.eq.s32.totalorder %s23, 3
    %p135 = por %p133, %p134
    %p136 = scmp.ne.s32.totalorder %s125, %s126
    %p137 = scmp.eq.s32.totalorder %s23, 0
    %p138 = por %p136, %p137
    %p139 = scmp.ne.s32.totalorder %s125, %s126
    %p140 = scmp.eq.s32.totalorder %s24, 3
    %p141 = por %p139, %p140
    %p143 = scmp.ne.s32.totalorder %s126, %s142
    %p144 = scmp.eq.s32.totalorder %s24, 0
    %p145 = por %p143, %p144
    %s146 = ssub.s32 %s25, %s37
    %p147 = scmp.eq.s32.totalorder %s146, 0
    %s149 = sadd.s32 %s148, 1
    %s150 = scalar_select %p147, %s148, %s149
    %p153 = pneg %p147
    %p154 = scmp.eq.s32.totalorder %s18, 3
    %p155 = por %p153, %p154
    %p156 = scmp.ne.s32.totalorder %s148, %s151
    %p157 = scmp.eq.s32.totalorder %s18, 0
    %p158 = por %p156, %p157
    %p159 = scmp.ne.s32.totalorder %s148, %s151
    %p160 = scmp.eq.s32.totalorder %s23, 3
    %p161 = por %p159, %p160
    %p162 = scmp.ne.s32.totalorder %s151, %s152
    %p163 = scmp.eq.s32.totalorder %s23, 0
    %p164 = por %p162, %p163
    %p165 = scmp.ne.s32.totalorder %s151, %s152
    %p166 = scmp.eq.s32.totalorder %s24, 3
    %p167 = por %p165, %p166
    %p169 = scmp.ne.s32.totalorder %s152, %s168
    %p170 = scmp.eq.s32.totalorder %s24, 0
    %p171 = por %p169, %p170
    %s172 = ssub.s32 %s25, %s37
    %s173 = ssub.s32 %s26, %s33
    %s174 = sor.u32 %s172, %s173
    %p175 = scmp.eq.s32.totalorder %s174, 0
    %s177 = sadd.s32 %s176, 1
    %s178 = scalar_select %p175, %s176, %s177
    %p181 = pneg %p175
    %p182 = scmp.eq.s32.totalorder %s18, 3
    %p183 = por %p181, %p182
    %p184 = scmp.ne.s32.totalorder %s176, %s179
    %p185 = scmp.eq.s32.totalorder %s18, 0
    %p186 = por %p184, %p185
    %p187 = scmp.ne.s32.totalorder %s176, %s179
    %p188 = scmp.eq.s32.totalorder %s23, 3
    %p189 = por %p187, %p188
    %p190 = scmp.ne.s32.totalorder %s179, %s180
    %p191 = scmp.eq.s32.totalorder %s23, 0
    %p192 = por %p190, %p191
    %p193 = scmp.ne.s32.totalorder %s179, %s180
    %p194 = scmp.eq.s32.totalorder %s24, 3
    %p195 = por %p193, %p194
    %p197 = scmp.ne.s32.totalorder %s180, %s196
    %p198 = scmp.eq.s32.totalorder %s24, 0
    %p199 = por %p197, %p198
    %p200 = scmp.le.s32.totalorder 1, %s18
    %p201 = scmp.lt.s32.totalorder %s18, 5
    %p202 = pnand %p200, %p201
    %p203 = pneg %p202
    // Predicated region
    $region9: #{region_dice_loss.1} parent=5 // pred_check
      _
    $region10: #{region_dice_loss.1} parent=5 // pred_check_branch
      %205 = sbr.rel (%p202) target = $region12
    $region11: #{region_dice_loss.1} parent=5 // pred_region
      %s206 = ssub.s32 %s18, 1
    $region12: #{region_dice_loss.1} parent=5 // pred_fallthru
      _
    %p207 = scmp.lt.s32.totalorder %s18, 4
    // Predicated region
    $region13: #{region_dice_loss.1} parent=5 // pred_check
      %p208 = pneg %p207
    $region14: #{region_dice_loss.1} parent=5 // pred_check_branch
      %210 = sbr.rel (%p208) target = $region16
    $region15: #{region_dice_loss.1} parent=5 // pred_region
      // Predicated region
      $region17: #{region_dice_loss.1} parent=15 // pred_check
        %p211 = pneg %p52
      $region18: #{region_dice_loss.1} parent=15 // pred_check_branch
        %213 = sbr.rel (%p211) target = $region20
      $region19: #{region_dice_loss.1} parent=15 // pred_region
        %s214 = smul.u32 2, %s26
        %p215 = scmp.lt.s32.totalorder %s25, 1
        %s216 = scalar_select %p215, %s25, 1
        %p217 = scmp.lt.s32.totalorder %s214, 3
        %s218 = scalar_select %p217, %s214, 3
        %s219 = smul.addr %s216, 4
        %s220 = sadd.s32 %s218, %s219
        %s221 = scalar_lea.vmem %s1, %s220
        %s222 = smul.u32 2, %s26
      $region20: #{region_dice_loss.1} parent=15 // pred_fallthru
        _
      // Predicated region
      $region21: #{region_dice_loss.1} parent=15 // pred_check
        %p223 = pneg %p80
      $region22: #{region_dice_loss.1} parent=15 // pred_check_branch
        %225 = sbr.rel (%p223) target = $region24
      $region23: #{region_dice_loss.1} parent=15 // pred_region
        %s226 = smul.u32 2, %s26
        %p227 = scmp.lt.s32.totalorder %s25, 1
        %s228 = scalar_select %p227, %s25, 1
        %p229 = scmp.lt.s32.totalorder %s226, 3
        %s230 = scalar_select %p229, %s226, 3
        %s231 = smul.addr %s228, 4
        %s232 = sadd.s32 %s230, %s231
        %s233 = scalar_lea.vmem %s2, %s232
        %s234 = smul.u32 2, %s26
      $region24: #{region_dice_loss.1} parent=15 // pred_fallthru
        _
      // Predicated region
      $region25: #{region_dice_loss.1} parent=15 // pred_check
        %p235 = pneg %p106
      $region26: #{region_dice_loss.1} parent=15 // pred_check_branch
        %237 = sbr.rel (%p235) target = $region28
      $region27: #{region_dice_loss.1} parent=15 // pred_region
        %s238 = smul.u32 32, %s26
        %p239 = scmp.lt.s32.totalorder %s238, 63
        %s240 = scalar_select %p239, %s238, 63
        %s241 = smul.addr %s240, 8
        %s242 = scalar_lea.vmem %s3, %s241
        %s243 = smul.u32 32, %s26
      $region28: #{region_dice_loss.1} parent=15 // pred_fallthru
        _
      // Predicated region
      $region29: #{region_dice_loss.1} parent=15 // pred_check
        %p244 = pneg %p132
      $region30: #{region_dice_loss.1} parent=15 // pred_check_branch
        %246 = sbr.rel (%p244) target = $region32
      $region31: #{region_dice_loss.1} parent=15 // pred_region
        %p247 = scmp.lt.s32.totalorder %s25, 1
        %s248 = scalar_select %p247, %s25, 1
        %s249 = smul.addr %s248, 4
        %s250 = smul.addr %s249, 8
        %s251 = scalar_lea.vmem %s4, %s250
      $region32: #{region_dice_loss.1} parent=15 // pred_fallthru
        _
      // Predicated region
      $region33: #{region_dice_loss.1} parent=15 // pred_check
        %p252 = pneg %p158
      $region34: #{region_dice_loss.1} parent=15 // pred_check_branch
        %254 = sbr.rel (%p252) target = $region36
      $region35: #{region_dice_loss.1} parent=15 // pred_region
        %p255 = scmp.lt.s32.totalorder %s25, 1
        %s256 = scalar_select %p255, %s25, 1
        %s257 = smul.addr %s256, 4
        %s258 = scalar_lea.vmem %s5, %s257
      $region36: #{region_dice_loss.1} parent=15 // pred_fallthru
        _
    $region16: #{region_dice_loss.1} parent=5 // pred_fallthru
      _
    %p259 = scmp.le.s32.totalorder 1, %s18
    %p260 = scmp.lt.s32.totalorder %s18, 5
    %p261 = pnand %p259, %p260
    %p262 = pneg %p261
    // Predicated region
    $region37: #{region_dice_loss.1} parent=5 // pred_check
      _
    $region38: #{region_dice_loss.1} parent=5 // pred_check_branch
      %264 = sbr.rel (%p261) target = $region40
    $region39: #{region_dice_loss.1} parent=5 // pred_region
      %s265 = ssub.s32 %s18, 1
      %s266 = smul.u32 2, %s28
      %p267 = scmp.lt.s32.totalorder %s27, 1
      %s268 = scalar_select %p267, %s27, 1
      %p269 = scmp.lt.s32.totalorder %s266, 3
      %s270 = scalar_select %p269, %s266, 3
      %s271 = smul.addr %s268, 4
      %s272 = sadd.s32 %s270, %s271
      %s273 = scalar_lea.vmem %s1, %s272
      %p274 = pneg %p58
      %p275 = pneg %p55
      %s276 = smul.u32 2, %s28
      %p277 = scmp.lt.s32.totalorder %s27, 1
      %s278 = scalar_select %p277, %s27, 1
      %p279 = scmp.lt.s32.totalorder %s276, 3
      %s280 = scalar_select %p279, %s276, 3
      %s281 = smul.addr %s278, 4
      %s282 = sadd.s32 %s280, %s281
      %s283 = scalar_lea.vmem %s2, %s282
      %p284 = pneg %p86
      %p285 = pneg %p83
      %s286 = smul.u32 32, %s28
      %p287 = scmp.lt.s32.totalorder %s286, 63
      %s288 = scalar_select %p287, %s286, 63
      %s289 = smul.addr %s288, 8
      %s290 = scalar_lea.vmem %s3, %s289
      %p291 = pneg %p112
      %p292 = pneg %p109
      %p293 = scmp.lt.s32.totalorder %s27, 1
      %s294 = scalar_select %p293, %s27, 1
      %s295 = smul.addr %s294, 4
      %s296 = smul.addr %s295, 8
      %s297 = scalar_lea.vmem %s4, %s296
      %p298 = pneg %p138
      %p299 = pneg %p135
      %p300 = scmp.lt.s32.totalorder %s27, 1
      %s301 = scalar_select %p300, %s27, 1
      %s302 = smul.addr %s301, 4
      %s303 = scalar_lea.vmem %s5, %s302
      %p304 = pneg %p164
      %p305 = pneg %p161
      %p306 = pneg %p192
      %p307 = pneg %p189
      %p308 = scmp.lt.s32.totalorder %s27, 1
      %s309 = scalar_select %p308, %s27, 1
      %p310 = scmp.lt.s32.totalorder %s28, 1
      %s311 = scalar_select %p310, %s28, 1
      %s312 = smul.addr %s309, 2
      %s313 = sadd.s32 %s311, %s312
      %s314 = smul.addr %s313, 4
      %s315 = scalar_lea.vmem %s6, %s314
      %s316 = smul.u32 2, %s28
      %p317 = scmp.lt.s32.totalorder %s27, 1
      %s318 = scalar_select %p317, %s27, 1
      %p319 = scmp.lt.s32.totalorder %s316, 3
      %s320 = scalar_select %p319, %s316, 3
      %s321 = smul.addr %s318, 4
      %s322 = sadd.s32 %s320, %s321
      %s323 = scalar_lea.vmem %s1, %s322
      %s324 = smul.u32 2, %s28
      %s325 = smul.u32 2, %s28
      %p326 = scmp.lt.s32.totalorder %s27, 1
      %s327 = scalar_select %p326, %s27, 1
      %p328 = scmp.lt.s32.totalorder %s325, 3
      %s329 = scalar_select %p328, %s325, 3
      %s330 = smul.addr %s327, 4
      %s331 = sadd.s32 %s329, %s330
      %s332 = scalar_lea.vmem %s2, %s331
      %s333 = smul.u32 2, %s28
      %s334 = smul.u32 32, %s28
      %p335 = scmp.lt.s32.totalorder %s334, 63
      %s336 = scalar_select %p335, %s334, 63
      %s337 = smul.addr %s336, 8
      %s338 = scalar_lea.vmem %s3, %s337
      %s339 = smul.u32 32, %s28
      %p340 = scmp.lt.s32.totalorder %s27, 1
      %s341 = scalar_select %p340, %s27, 1
      %s342 = smul.addr %s341, 4
      %s343 = smul.addr %s342, 8
      %s344 = scalar_lea.vmem %s4, %s343
      %p345 = scmp.lt.s32.totalorder %s27, 1
      %s346 = scalar_select %p345, %s27, 1
      %s347 = smul.addr %s346, 4
      %s348 = scalar_lea.vmem %s5, %s347
      %p349 = scmp.lt.s32.totalorder %s27, 1
      %s350 = scalar_select %p349, %s27, 1
      %p351 = scmp.lt.s32.totalorder %s28, 1
      %s352 = scalar_select %p351, %s28, 1
      %s353 = smul.addr %s350, 2
      %s354 = sadd.s32 %s352, %s353
      %s355 = smul.addr %s354, 4
      %s356 = scalar_lea.vmem %s6, %s355
      %s357 = sld [smem:[#allocation4 + %s27]]
      %358 = vst [vmem:[#allocation2] sm:$0xff] 1.0737418e+09
      %359 = vst [vmem:[#allocation2 + $0x8] sm:$0xff] 1.0737418e+09
      %360 = vst [vmem:[#allocation2 + $0x10] sm:$0xff] 1.0737418e+09
      %361 = vst [vmem:[#allocation2 + $0x18] sm:$0xff] 1.0737418e+09
      %362 = vst [vmem:[#allocation2 + $0x20] sm:$0xff] 1.0737418e+09
      %363 = vst [vmem:[#allocation2 + $0x28] sm:$0xff] 1.0737418e+09
      %364 = vst [vmem:[#allocation2 + $0x30] sm:$0xff] 1.0737418e+09
      %365 = vst [vmem:[#allocation2 + $0x38] sm:$0xff] 1.0737418e+09
      %366 = vst [vmem:[#allocation2 + $0x40] sm:$0xff] 1.0737418e+09
      %367 = vst [vmem:[#allocation2 + $0x48] sm:$0xff] 1.0737418e+09
      %368 = vst [vmem:[#allocation2 + $0x50] sm:$0xff] 1.0737418e+09
      %369 = vst [vmem:[#allocation2 + $0x58] sm:$0xff] 1.0737418e+09
      %370 = vst [vmem:[#allocation2 + $0x60] sm:$0xff] 1.0737418e+09
      %371 = vst [vmem:[#allocation2 + $0x68] sm:$0xff] 1.0737418e+09
      %372 = vst [vmem:[#allocation2 + $0x70] sm:$0xff] 1.0737418e+09
      %373 = vst [vmem:[#allocation2 + $0x78] sm:$0xff] 1.0737418e+09
      %374 = vst [vmem:[#allocation2 + $0x80] sm:$0xff] 1.0737418e+09
      %375 = vst [vmem:[#allocation2 + $0x88] sm:$0xff] 1.0737418e+09
      %376 = vst [vmem:[#allocation2 + $0x90] sm:$0xff] 1.0737418e+09
      %377 = vst [vmem:[#allocation2 + $0x98] sm:$0xff] 1.0737418e+09
      %378 = vst [vmem:[#allocation2 + $0xa0] sm:$0xff] 1.0737418e+09
      %379 = vst [vmem:[#allocation2 + $0xa8] sm:$0xff] 1.0737418e+09
      %380 = vst [vmem:[#allocation2 + $0xb0] sm:$0xff] 1.0737418e+09
      %381 = vst [vmem:[#allocation2 + $0xb8] sm:$0xff] 1.0737418e+09
      %382 = vst [vmem:[#allocation2 + $0xc0] sm:$0xff] 1.0737418e+09
      %383 = vst [vmem:[#allocation2 + $0xc8] sm:$0xff] 1.0737418e+09
      %384 = vst [vmem:[#allocation2 + $0xd0] sm:$0xff] 1.0737418e+09
      %385 = vst [vmem:[#allocation2 + $0xd8] sm:$0xff] 1.0737418e+09
      %386 = vst [vmem:[#allocation2 + $0xe0] sm:$0xff] 1.0737418e+09
      %387 = vst [vmem:[#allocation2 + $0xe8] sm:$0xff] 1.0737418e+09
      %388 = vst [vmem:[#allocation2 + $0xf0] sm:$0xff] 1.0737418e+09
      %389 = vst [vmem:[#allocation2 + $0xf8] sm:$0xff] 1.0737418e+09
      // While loop
      $region41: #{region_dice_loss.1} parent=39 // loop_pre_header
        _
      $region42: #{region_dice_loss.1} parent=39 // loop_header
        %s391 = sphi 0, %s393
        %p392 = scmp.ge.s32.totalorder %s391, %s357
      $region43: #{region_dice_loss.1} parent=39 // loop_header_branch
        %395 = sbr.rel (%p392) target = $region47
      $region44: #{region_dice_loss.1} parent=39 // loop_body
        %s396 = smul.u32 %s391, 512
        %s397 = sshra.s32 %s396, 7
        %s398 = sand.u32 %s396, 127
        %s399 = smul.addr %s397, 8
        %s400 = scalar_lea.vmem %s344, %s399
        %v401 = vld [vmem:[%s400] sm:$0xff]
        %v402 = vld [vmem:[%s400 + $0x8] sm:$0xff]
        %v403 = vld [vmem:[%s400 + $0x10] sm:$0xff]
        %v404 = vld [vmem:[%s400 + $0x18] sm:$0xff]
        %s405 = scalar_lea.vmem %s348, %s397
        %v406 = vld [vmem:[%s405] sm:$0xf]
        %v407 = vld [vmem:[%s338] sm:$0xff]
        %v408 = vld [vmem:[%s338 + $0x8] sm:$0xff]
        %v409 = vld [vmem:[%s338 + $0x10] sm:$0xff]
        %v410 = vld [vmem:[%s338 + $0x18] sm:$0xff]
        %v411 = vld [vmem:[%s338 + $0x20] sm:$0xff]
        %v412 = vld [vmem:[%s338 + $0x28] sm:$0xff]
        %v413 = vld [vmem:[%s338 + $0x30] sm:$0xff]
        %v414 = vld [vmem:[%s338 + $0x38] sm:$0xff]
        %v415 = vld [vmem:[%s338 + $0x40] sm:$0xff]
        %v416 = vld [vmem:[%s338 + $0x48] sm:$0xff]
        %v417 = vld [vmem:[%s338 + $0x50] sm:$0xff]
        %v418 = vld [vmem:[%s338 + $0x58] sm:$0xff]
        %v419 = vld [vmem:[%s338 + $0x60] sm:$0xff]
        %v420 = vld [vmem:[%s338 + $0x68] sm:$0xff]
        %v421 = vld [vmem:[%s338 + $0x70] sm:$0xff]
        %v422 = vld [vmem:[%s338 + $0x78] sm:$0xff]
        %v423 = vld [vmem:[%s338 + $0x80] sm:$0xff]
        %v424 = vld [vmem:[%s338 + $0x88] sm:$0xff]
        %v425 = vld [vmem:[%s338 + $0x90] sm:$0xff]
        %v426 = vld [vmem:[%s338 + $0x98] sm:$0xff]
        %v427 = vld [vmem:[%s338 + $0xa0] sm:$0xff]
        %v428 = vld [vmem:[%s338 + $0xa8] sm:$0xff]
        %v429 = vld [vmem:[%s338 + $0xb0] sm:$0xff]
        %v430 = vld [vmem:[%s338 + $0xb8] sm:$0xff]
        %v431 = vld [vmem:[%s338 + $0xc0] sm:$0xff]
        %v432 = vld [vmem:[%s338 + $0xc8] sm:$0xff]
        %v433 = vld [vmem:[%s338 + $0xd0] sm:$0xff]
        %v434 = vld [vmem:[%s338 + $0xd8] sm:$0xff]
        %v435 = vld [vmem:[%s338 + $0xe0] sm:$0xff]
        %v436 = vld [vmem:[%s338 + $0xe8] sm:$0xff]
        %v437 = vld [vmem:[%s338 + $0xf0] sm:$0xff]
        %v438 = vld [vmem:[%s338 + $0xf8] sm:$0xff]
        %vm439 = vcmask 64512
        %v441 = vsel %vm439, %v407, 0
        %v444 = vsel %vm439, %v408, 0
        %v447 = vsel %vm439, %v409, 0
        %v450 = vsel %vm439, %v410, 0
        %v453 = vsel %vm439, %v411, 0
        %v456 = vsel %vm439, %v412, 0
        %v459 = vsel %vm439, %v413, 0
        %v462 = vsel %vm439, %v414, 0
        %v465 = vsel %vm439, %v415, 0
        %v468 = vsel %vm439, %v416, 0
        %v471 = vsel %vm439, %v417, 0
        %v474 = vsel %vm439, %v418, 0
        %v477 = vsel %vm439, %v419, 0
        %v480 = vsel %vm439, %v420, 0
        %v483 = vsel %vm439, %v421, 0
        %v486 = vsel %vm439, %v422, 0
        %v489 = vsel %vm439, %v423, 0
        %v492 = vsel %vm439, %v424, 0
        %v495 = vsel %vm439, %v425, 0
        %v498 = vsel %vm439, %v426, 0
        %v501 = vsel %vm439, %v427, 0
        %v504 = vsel %vm439, %v428, 0
        %v507 = vsel %vm439, %v429, 0
        %v510 = vsel %vm439, %v430, 0
        %v513 = vsel %vm439, %v431, 0
        %v516 = vsel %vm439, %v432, 0
        %v519 = vsel %vm439, %v433, 0
        %v522 = vsel %vm439, %v434, 0
        %v525 = vsel %vm439, %v435, 0
        %v528 = vsel %vm439, %v436, 0
        %v531 = vsel %vm439, %v437, 0
        %v534 = vsel %vm439, %v438, 0
        %536 = vmatprep.subr.mxu0 %v402
        %537 = vmatpush1.msra.mxu0 %v401
        %538 = vmatprep.subr.mxu0 0.0
        %539 = vmatpush1.msra.mxu0 0.0
        %540 = vmatprep.subr.mxu0 0.0
        %541 = vmatpush1.msra.mxu0 0.0
        %542 = vmatprep.subr.mxu0 0.0
        %543 = vmatpush1.msra.mxu0 0.0
        %544 = vmatprep.subr.mxu0 0.0
        %545 = vmatpush1.msra.mxu0 0.0
        %546 = vmatprep.subr.mxu0 0.0
        %547 = vmatpush1.msra.mxu0 0.0
        %548 = vmatprep.subr.mxu0 0.0
        %549 = vmatpush1.msra.mxu0 0.0
        %550 = vmatprep.subr.mxu0 0.0
        %551 = vmatpush1.msra.mxu0 0.0
        %552 = vmatprep.subr.mxu0 0.0
        %553 = vmatpush1.msra.mxu0 0.0
        %554 = vmatprep.subr.mxu0 0.0
        %555 = vmatpush1.msra.mxu0 0.0
        %556 = vmatprep.subr.mxu0 0.0
        %557 = vmatpush1.msra.mxu0 0.0
        %558 = vmatprep.subr.mxu0 0.0
        %559 = vmatpush1.msra.mxu0 0.0
        %560 = vmatprep.subr.mxu0 0.0
        %561 = vmatpush1.msra.mxu0 0.0
        %562 = vmatprep.subr.mxu0 0.0
        %563 = vmatpush1.msra.mxu0 0.0
        %564 = vmatprep.subr.mxu0 0.0
        %565 = vmatpush1.msra.mxu0 0.0
        %566 = vmatprep.subr.mxu0 0.0
        %567 = vmatpush1.msra.mxu0 0.0
        %568 = vmatprep.subr.mxu0 0.0
        %569 = vmatpush1.msra.mxu0 0.0
        %570 = vmatprep.subr.mxu0 0.0
        %571 = vmatpush1.msra.mxu0 0.0
        %572 = vmatprep.subr.mxu0 0.0
        %573 = vmatpush1.msra.mxu0 0.0
        %574 = vmatprep.subr.mxu0 0.0
        %575 = vmatpush1.msra.mxu0 0.0
        %576 = vmatprep.subr.mxu0 0.0
        %577 = vmatpush1.msra.mxu0 0.0
        %578 = vmatprep.subr.mxu0 0.0
        %579 = vmatpush1.msra.mxu0 0.0
        %580 = vmatprep.subr.mxu0 0.0
        %581 = vmatpush1.msra.mxu0 0.0
        %582 = vmatprep.subr.mxu0 0.0
        %583 = vmatpush1.msra.mxu0 0.0
        %584 = vmatprep.subr.mxu0 0.0
        %585 = vmatpush1.msra.mxu0 0.0
        %586 = vmatprep.subr.mxu0 0.0
        %587 = vmatpush1.msra.mxu0 0.0
        %588 = vmatprep.subr.mxu0 0.0
        %589 = vmatpush1.msra.mxu0 0.0
        %590 = vmatprep.subr.mxu0 0.0
        %591 = vmatpush1.msra.mxu0 0.0
        %592 = vmatprep.subr.mxu0 0.0
        %593 = vmatpush1.msra.mxu0 0.0
        %594 = vmatprep.subr.mxu0 0.0
        %595 = vmatpush1.msra.mxu0 0.0
        %596 = vmatprep.subr.mxu0 0.0
        %597 = vmatpush1.msra.mxu0 0.0
        %598 = vmatprep.subr.mxu0 0.0
        %599 = vmatpush1.msra.mxu0 0.0
        %600 = vmatprep.mubr.f32.mxu0 0.0
        %601 = vmatmul.mubr.f32.gmra.mrb[0].mxu0 %v441
        %v602 = vpop.f32.mrb[0].mxu0
        %v603 = vadd.f32 0.0, %v602
        %v604 = vpop.f32.mrb[0].mxu0
        %v605 = vadd.f32 0.0, %v604
        %606 = vmatprep.mubr.f32.mxu0 0.0
        %607 = vmatmul.mubr.f32.gmra.mrb[0].mxu0 %v444
        %v608 = vpop.f32.mrb[0].mxu0
        %v609 = vadd.f32 0.0, %v608
        %v610 = vpop.f32.mrb[0].mxu0
        %v611 = vadd.f32 0.0, %v610
        %612 = vmatprep.mubr.f32.mxu0 0.0
        %613 = vmatmul.mubr.f32.gmra.mrb[0].mxu0 %v447
        %v614 = vpop.f32.mrb[0].mxu0
        %v615 = vadd.f32 0.0, %v614
        %v616 = vpop.f32.mrb[0].mxu0
        %v617 = vadd.f32 0.0, %v616
        %618 = vmatprep.mubr.f32.mxu0 0.0
        %619 = vmatmul.mubr.f32.gmra.mrb[0].mxu0 %v450
        %v620 = vpop.f32.mrb[0].mxu0
        %v621 = vadd.f32 0.0, %v620
        %v622 = vpop.f32.mrb[0].mxu0
        %v623 = vadd.f32 0.0, %v622
        %624 = vmatprep.mubr.f32.mxu0 0.0
        %625 = vmatmul.mubr.f32.gmra.mrb[0].mxu0 %v453
        %v626 = vpop.f32.mrb[0].mxu0
        %v627 = vadd.f32 0.0, %v626
        %v628 = vpop.f32.mrb[0].mxu0
        %v629 = vadd.f32 0.0, %v628
        %630 = vmatprep.mubr.f32.mxu0 0.0
        %631 = vmatmul.mubr.f32.gmra.mrb[0].mxu0 %v456
        %v632 = vpop.f32.mrb[0].mxu0
        %v633 = vadd.f32 0.0, %v632
        %v634 = vpop.f32.mrb[0].mxu0
        %v635 = vadd.f32 0.0, %v634
        %636 = vmatprep.mubr.f32.mxu0 0.0
        %637 = vmatmul.mubr.f32.gmra.mrb[0].mxu0 %v459
        %v638 = vpop.f32.mrb[0].mxu0
        %v639 = vadd.f32 0.0, %v638
        %v640 = vpop.f32.mrb[0].mxu0
        %v641 = vadd.f32 0.0, %v640
        %642 = vmatprep.mubr.f32.mxu0 0.0
        %643 = vmatmul.mubr.f32.gmra.mrb[0].mxu0 %v462
        %v644 = vpop.f32.mrb[0].mxu0
        %v645 = vadd.f32 0.0, %v644
        %v646 = vpop.f32.mrb[0].mxu0
        %v647 = vadd.f32 0.0, %v646
        %648 = vmatprep.mubr.f32.mxu0 0.0
        %649 = vmatmul.mubr.f32.gmra.mrb[0].mxu0 %v465
        %v650 = vpop.f32.mrb[0].mxu0
        %v651 = vadd.f32 0.0, %v650
        %v652 = vpop.f32.mrb[0].mxu0
        %v653 = vadd.f32 0.0, %v652
        %654 = vmatprep.mubr.f32.mxu0 0.0
        %655 = vmatmul.mubr.f32.gmra.mrb[0].mxu0 %v468
        %v656 = vpop.f32.mrb[0].mxu0
        %v657 = vadd.f32 0.0, %v656
        %v658 = vpop.f32.mrb[0].mxu0
        %v659 = vadd.f32 0.0, %v658
        %660 = vmatprep.mubr.f32.mxu0 0.0
        %661 = vmatmul.mubr.f32.gmra.mrb[0].mxu0 %v471
        %v662 = vpop.f32.mrb[0].mxu0
        %v663 = vadd.f32 0.0, %v662
        %v664 = vpop.f32.mrb[0].mxu0
        %v665 = vadd.f32 0.0, %v664
        %666 = vmatprep.mubr.f32.mxu0 0.0
        %667 = vmatmul.mubr.f32.gmra.mrb[0].mxu0 %v474
        %v668 = vpop.f32.mrb[0].mxu0
        %v669 = vadd.f32 0.0, %v668
        %v670 = vpop.f32.mrb[0].mxu0
        %v671 = vadd.f32 0.0, %v670
        %672 = vmatprep.mubr.f32.mxu0 0.0
        %673 = vmatmul.mubr.f32.gmra.mrb[0].mxu0 %v477
        %v674 = vpop.f32.mrb[0].mxu0
        %v675 = vadd.f32 0.0, %v674
        %v676 = vpop.f32.mrb[0].mxu0
        %v677 = vadd.f32 0.0, %v676
        %678 = vmatprep.mubr.f32.mxu0 0.0
        %679 = vmatmul.mubr.f32.gmra.mrb[0].mxu0 %v480
        %v680 = vpop.f32.mrb[0].mxu0
        %v681 = vadd.f32 0.0, %v680
        %v682 = vpop.f32.mrb[0].mxu0
        %v683 = vadd.f32 0.0, %v682
        %684 = vmatprep.mubr.f32.mxu0 0.0
        %685 = vmatmul.mubr.f32.gmra.mrb[0].mxu0 %v483
        %v686 = vpop.f32.mrb[0].mxu0
        %v687 = vadd.f32 0.0, %v686
        %v688 = vpop.f32.mrb[0].mxu0
        %v689 = vadd.f32 0.0, %v688
        %690 = vmatprep.mubr.f32.mxu0 0.0
        %691 = vmatmul.mubr.f32.gmra.mrb[0].mxu0 %v486
        %v692 = vpop.f32.mrb[0].mxu0
        %v693 = vadd.f32 0.0, %v692
        %v694 = vpop.f32.mrb[0].mxu0
        %v695 = vadd.f32 0.0, %v694
        %696 = vmatprep.mubr.f32.mxu0 0.0
        %697 = vmatmul.mubr.f32.gmra.mrb[0].mxu0 %v489
        %v698 = vpop.f32.mrb[0].mxu0
        %v699 = vadd.f32 0.0, %v698
        %v700 = vpop.f32.mrb[0].mxu0
        %v701 = vadd.f32 0.0, %v700
        %702 = vmatprep.mubr.f32.mxu0 0.0
        %703 = vmatmul.mubr.f32.gmra.mrb[0].mxu0 %v492
        %v704 = vpop.f32.mrb[0].mxu0
        %v705 = vadd.f32 0.0, %v704
        %v706 = vpop.f32.mrb[0].mxu0
        %v707 = vadd.f32 0.0, %v706
        %708 = vmatprep.mubr.f32.mxu0 0.0
        %709 = vmatmul.mubr.f32.gmra.mrb[0].mxu0 %v495
        %v710 = vpop.f32.mrb[0].mxu0
        %v711 = vadd.f32 0.0, %v710
        %v712 = vpop.f32.mrb[0].mxu0
        %v713 = vadd.f32 0.0, %v712
        %714 = vmatprep.mubr.f32.mxu0 0.0
        %715 = vmatmul.mubr.f32.gmra.mrb[0].mxu0 %v498
        %v716 = vpop.f32.mrb[0].mxu0
        %v717 = vadd.f32 0.0, %v716
        %v718 = vpop.f32.mrb[0].mxu0
        %v719 = vadd.f32 0.0, %v718
        %720 = vmatprep.mubr.f32.mxu0 0.0
        %721 = vmatmul.mubr.f32.gmra.mrb[0].mxu0 %v501
        %v722 = vpop.f32.mrb[0].mxu0
        %v723 = vadd.f32 0.0, %v722
        %v724 = vpop.f32.mrb[0].mxu0
        %v725 = vadd.f32 0.0, %v724
        %726 = vmatprep.mubr.f32.mxu0 0.0
        %727 = vmatmul.mubr.f32.gmra.mrb[0].mxu0 %v504
        %v728 = vpop.f32.mrb[0].mxu0
        %v729 = vadd.f32 0.0, %v728
        %v730 = vpop.f32.mrb[0].mxu0
        %v731 = vadd.f32 0.0, %v730
        %732 = vmatprep.mubr.f32.mxu0 0.0
        %733 = vmatmul.mubr.f32.gmra.mrb[0].mxu0 %v507
        %v734 = vpop.f32.mrb[0].mxu0
        %v735 = vadd.f32 0.0, %v734
        %v736 = vpop.f32.mrb[0].mxu0
        %v737 = vadd.f32 0.0, %v736
        %738 = vmatprep.mubr.f32.mxu0 0.0
        %739 = vmatmul.mubr.f32.gmra.mrb[0].mxu0 %v510
        %v740 = vpop.f32.mrb[0].mxu0
        %v741 = vadd.f32 0.0, %v740
        %v742 = vpop.f32.mrb[0].mxu0
        %v743 = vadd.f32 0.0, %v742
        %744 = vmatprep.mubr.f32.mxu0 0.0
        %745 = vmatmul.mubr.f32.gmra.mrb[0].mxu0 %v513
        %v746 = vpop.f32.mrb[0].mxu0
        %v747 = vadd.f32 0.0, %v746
        %v748 = vpop.f32.mrb[0].mxu0
        %v749 = vadd.f32 0.0, %v748
        %750 = vmatprep.mubr.f32.mxu0 0.0
        %751 = vmatmul.mubr.f32.gmra.mrb[0].mxu0 %v516
        %v752 = vpop.f32.mrb[0].mxu0
        %v753 = vadd.f32 0.0, %v752
        %v754 = vpop.f32.mrb[0].mxu0
        %v755 = vadd.f32 0.0, %v754
        %756 = vmatprep.mubr.f32.mxu0 0.0
        %757 = vmatmul.mubr.f32.gmra.mrb[0].mxu0 %v519
        %v758 = vpop.f32.mrb[0].mxu0
        %v759 = vadd.f32 0.0, %v758
        %v760 = vpop.f32.mrb[0].mxu0
        %v761 = vadd.f32 0.0, %v760
        %762 = vmatprep.mubr.f32.mxu0 0.0
        %763 = vmatmul.mubr.f32.gmra.mrb[0].mxu0 %v522
        %v764 = vpop.f32.mrb[0].mxu0
        %v765 = vadd.f32 0.0, %v764
        %v766 = vpop.f32.mrb[0].mxu0
        %v767 = vadd.f32 0.0, %v766
        %768 = vmatprep.mubr.f32.mxu0 0.0
        %769 = vmatmul.mubr.f32.gmra.mrb[0].mxu0 %v525
        %v770 = vpop.f32.mrb[0].mxu0
        %v771 = vadd.f32 0.0, %v770
        %v772 = vpop.f32.mrb[0].mxu0
        %v773 = vadd.f32 0.0, %v772
        %774 = vmatprep.mubr.f32.mxu0 0.0
        %775 = vmatmul.mubr.f32.gmra.mrb[0].mxu0 %v528
        %v776 = vpop.f32.mrb[0].mxu0
        %v777 = vadd.f32 0.0, %v776
        %v778 = vpop.f32.mrb[0].mxu0
        %v779 = vadd.f32 0.0, %v778
        %780 = vmatprep.mubr.f32.mxu0 0.0
        %781 = vmatmul.mubr.f32.gmra.mrb[0].mxu0 %v531
        %v782 = vpop.f32.mrb[0].mxu0
        %v783 = vadd.f32 0.0, %v782
        %v784 = vpop.f32.mrb[0].mxu0
        %v785 = vadd.f32 0.0, %v784
        %786 = vmatprep.mubr.f32.mxu0 0.0
        %787 = vmatmul.mubr.f32.gmra.mrb[0].mxu0 %v534
        %v788 = vpop.f32.mrb[0].mxu0
        %v789 = vadd.f32 0.0, %v788
        %v790 = vpop.f32.mrb[0].mxu0
        %v791 = vadd.f32 0.0, %v790
        %792 = vdwg.mxu0
        %793 = vmatprep.subr.mxu0 %v404
        %794 = vmatpush1.msra.mxu0 %v403
        %795 = vmatprep.subr.mxu0 0.0
        %796 = vmatpush1.msra.mxu0 0.0
        %797 = vmatprep.subr.mxu0 0.0
        %798 = vmatpush1.msra.mxu0 0.0
        %799 = vmatprep.subr.mxu0 0.0
        %800 = vmatpush1.msra.mxu0 0.0
        %801 = vmatprep.subr.mxu0 0.0
        %802 = vmatpush1.msra.mxu0 0.0
        %803 = vmatprep.subr.mxu0 0.0
        %804 = vmatpush1.msra.mxu0 0.0
        %805 = vmatprep.subr.mxu0 0.0
        %806 = vmatpush1.msra.mxu0 0.0
        %807 = vmatprep.subr.mxu0 0.0
        %808 = vmatpush1.msra.mxu0 0.0
        %809 = vmatprep.subr.mxu0 0.0
        %810 = vmatpush1.msra.mxu0 0.0
        %811 = vmatprep.subr.mxu0 0.0
        %812 = vmatpush1.msra.mxu0 0.0
        %813 = vmatprep.subr.mxu0 0.0
        %814 = vmatpush1.msra.mxu0 0.0
        %815 = vmatprep.subr.mxu0 0.0
        %816 = vmatpush1.msra.mxu0 0.0
        %817 = vmatprep.subr.mxu0 0.0
        %818 = vmatpush1.msra.mxu0 0.0
        %819 = vmatprep.subr.mxu0 0.0
        %820 = vmatpush1.msra.mxu0 0.0
        %821 = vmatprep.subr.mxu0 0.0
        %822 = vmatpush1.msra.mxu0 0.0
        %823 = vmatprep.subr.mxu0 0.0
        %824 = vmatpush1.msra.mxu0 0.0
        %825 = vmatprep.subr.mxu0 0.0
        %826 = vmatpush1.msra.mxu0 0.0
        %827 = vmatprep.subr.mxu0 0.0
        %828 = vmatpush1.msra.mxu0 0.0
        %829 = vmatprep.subr.mxu0 0.0
        %830 = vmatpush1.msra.mxu0 0.0
        %831 = vmatprep.subr.mxu0 0.0
        %832 = vmatpush1.msra.mxu0 0.0
        %833 = vmatprep.subr.mxu0 0.0
        %834 = vmatpush1.msra.mxu0 0.0
        %835 = vmatprep.subr.mxu0 0.0
        %836 = vmatpush1.msra.mxu0 0.0
        %837 = vmatprep.subr.mxu0 0.0
        %838 = vmatpush1.msra.mxu0 0.0
        %839 = vmatprep.subr.mxu0 0.0
        %840 = vmatpush1.msra.mxu0 0.0
        %841 = vmatprep.subr.mxu0 0.0
        %842 = vmatpush1.msra.mxu0 0.0
        %843 = vmatprep.subr.mxu0 0.0
        %844 = vmatpush1.msra.mxu0 0.0
        %845 = vmatprep.subr.mxu0 0.0
        %846 = vmatpush1.msra.mxu0 0.0
        %847 = vmatprep.subr.mxu0 0.0
        %848 = vmatpush1.msra.mxu0 0.0
        %849 = vmatprep.subr.mxu0 0.0
        %850 = vmatpush1.msra.mxu0 0.0
        %851 = vmatprep.subr.mxu0 0.0
        %852 = vmatpush1.msra.mxu0 0.0
        %853 = vmatprep.subr.mxu0 0.0
        %854 = vmatpush1.msra.mxu0 0.0
        %855 = vmatprep.subr.mxu0 0.0
        %856 = vmatpush1.msra.mxu0 0.0
        %857 = vmatprep.mubr.f32.mxu0 0.0
        %858 = vmatmul.mubr.f32.gmra.mrb[0].mxu0 %v441
        %v859 = vpop.f32.mrb[0].mxu0
        %v860 = vadd.f32 0.0, %v859
        %v861 = vpop.f32.mrb[0].mxu0
        %v862 = vadd.f32 0.0, %v861
        %863 = vmatprep.mubr.f32.mxu0 0.0
        %864 = vmatmul.mubr.f32.gmra.mrb[0].mxu0 %v444
        %v865 = vpop.f32.mrb[0].mxu0
        %v866 = vadd.f32 0.0, %v865
        %v867 = vpop.f32.mrb[0].mxu0
        %v868 = vadd.f32 0.0, %v867
        %869 = vmatprep.mubr.f32.mxu0 0.0
        %870 = vmatmul.mubr.f32.gmra.mrb[0].mxu0 %v447
        %v871 = vpop.f32.mrb[0].mxu0
        %v872 = vadd.f32 0.0, %v871
        %v873 = vpop.f32.mrb[0].mxu0
        %v874 = vadd.f32 0.0, %v873
        %875 = vmatprep.mubr.f32.mxu0 0.0
        %876 = vmatmul.mubr.f32.gmra.mrb[0].mxu0 %v450
        %v877 = vpop.f32.mrb[0].mxu0
        %v878 = vadd.f32 0.0, %v877
        %v879 = vpop.f32.mrb[0].mxu0
        %v880 = vadd.f32 0.0, %v879
        %881 = vmatprep.mubr.f32.mxu0 0.0
        %882 = vmatmul.mubr.f32.gmra.mrb[0].mxu0 %v453
        %v883 = vpop.f32.mrb[0].mxu0
        %v884 = vadd.f32 0.0, %v883
        %v885 = vpop.f32.mrb[0].mxu0
        %v886 = vadd.f32 0.0, %v885
        %887 = vmatprep.mubr.f32.mxu0 0.0
        %888 = vmatmul.mubr.f32.gmra.mrb[0].mxu0 %v456
        %v889 = vpop.f32.mrb[0].mxu0
        %v890 = vadd.f32 0.0, %v889
        %v891 = vpop.f32.mrb[0].mxu0
        %v892 = vadd.f32 0.0, %v891
        %893 = vmatprep.mubr.f32.mxu0 0.0
        %894 = vmatmul.mubr.f32.gmra.mrb[0].mxu0 %v459
        %v895 = vpop.f32.mrb[0].mxu0
        %v896 = vadd.f32 0.0, %v895
        %v897 = vpop.f32.mrb[0].mxu0
        %v898 = vadd.f32 0.0, %v897
        %899 = vmatprep.mubr.f32.mxu0 0.0
        %900 = vmatmul.mubr.f32.gmra.mrb[0].mxu0 %v462
        %v901 = vpop.f32.mrb[0].mxu0
        %v902 = vadd.f32 0.0, %v901
        %v903 = vpop.f32.mrb[0].mxu0
        %v904 = vadd.f32 0.0, %v903
        %905 = vmatprep.mubr.f32.mxu0 0.0
        %906 = vmatmul.mubr.f32.gmra.mrb[0].mxu0 %v465
        %v907 = vpop.f32.mrb[0].mxu0
        %v908 = vadd.f32 0.0, %v907
        %v909 = vpop.f32.mrb[0].mxu0
        %v910 = vadd.f32 0.0, %v909
        %911 = vmatprep.mubr.f32.mxu0 0.0
        %912 = vmatmul.mubr.f32.gmra.mrb[0].mxu0 %v468
        %v913 = vpop.f32.mrb[0].mxu0
        %v914 = vadd.f32 0.0, %v913
        %v915 = vpop.f32.mrb[0].mxu0
        %v916 = vadd.f32 0.0, %v915
        %917 = vmatprep.mubr.f32.mxu0 0.0
        %918 = vmatmul.mubr.f32.gmra.mrb[0].mxu0 %v471
        %v919 = vpop.f32.mrb[0].mxu0
        %v920 = vadd.f32 0.0, %v919
        %v921 = vpop.f32.mrb[0].mxu0
        %v922 = vadd.f32 0.0, %v921
        %923 = vmatprep.mubr.f32.mxu0 0.0
        %924 = vmatmul.mubr.f32.gmra.mrb[0].mxu0 %v474
        %v925 = vpop.f32.mrb[0].mxu0
        %v926 = vadd.f32 0.0, %v925
        %v927 = vpop.f32.mrb[0].mxu0
        %v928 = vadd.f32 0.0, %v927
        %929 = vmatprep.mubr.f32.mxu0 0.0
        %930 = vmatmul.mubr.f32.gmra.mrb[0].mxu0 %v477
        %v931 = vpop.f32.mrb[0].mxu0
        %v932 = vadd.f32 0.0, %v931
        %v933 = vpop.f32.mrb[0].mxu0
        %v934 = vadd.f32 0.0, %v933
        %935 = vmatprep.mubr.f32.mxu0 0.0
        %936 = vmatmul.mubr.f32.gmra.mrb[0].mxu0 %v480
        %v937 = vpop.f32.mrb[0].mxu0
        %v938 = vadd.f32 0.0, %v937
        %v939 = vpop.f32.mrb[0].mxu0
        %v940 = vadd.f32 0.0, %v939
        %941 = vmatprep.mubr.f32.mxu0 0.0
        %942 = vmatmul.mubr.f32.gmra.mrb[0].mxu0 %v483
        %v943 = vpop.f32.mrb[0].mxu0
        %v944 = vadd.f32 0.0, %v943
        %v945 = vpop.f32.mrb[0].mxu0
        %v946 = vadd.f32 0.0, %v945
        %947 = vmatprep.mubr.f32.mxu0 0.0
        %948 = vmatmul.mubr.f32.gmra.mrb[0].mxu0 %v486
        %v949 = vpop.f32.mrb[0].mxu0
        %v950 = vadd.f32 0.0, %v949
        %v951 = vpop.f32.mrb[0].mxu0
        %v952 = vadd.f32 0.0, %v951
        %953 = vmatprep.mubr.f32.mxu0 0.0
        %954 = vmatmul.mubr.f32.gmra.mrb[0].mxu0 %v489
        %v955 = vpop.f32.mrb[0].mxu0
        %v956 = vadd.f32 0.0, %v955
        %v957 = vpop.f32.mrb[0].mxu0
        %v958 = vadd.f32 0.0, %v957
        %959 = vmatprep.mubr.f32.mxu0 0.0
        %960 = vmatmul.mubr.f32.gmra.mrb[0].mxu0 %v492
        %v961 = vpop.f32.mrb[0].mxu0
        %v962 = vadd.f32 0.0, %v961
        %v963 = vpop.f32.mrb[0].mxu0
        %v964 = vadd.f32 0.0, %v963
        %965 = vmatprep.mubr.f32.mxu0 0.0
        %966 = vmatmul.mubr.f32.gmra.mrb[0].mxu0 %v495
        %v967 = vpop.f32.mrb[0].mxu0
        %v968 = vadd.f32 0.0, %v967
        %v969 = vpop.f32.mrb[0].mxu0
        %v970 = vadd.f32 0.0, %v969
        %971 = vmatprep.mubr.f32.mxu0 0.0
        %972 = vmatmul.mubr.f32.gmra.mrb[0].mxu0 %v498
        %v973 = vpop.f32.mrb[0].mxu0
        %v974 = vadd.f32 0.0, %v973
        %v975 = vpop.f32.mrb[0].mxu0
        %v976 = vadd.f32 0.0, %v975
        %977 = vmatprep.mubr.f32.mxu0 0.0
        %978 = vmatmul.mubr.f32.gmra.mrb[0].mxu0 %v501
        %v979 = vpop.f32.mrb[0].mxu0
        %v980 = vadd.f32 0.0, %v979
        %v981 = vpop.f32.mrb[0].mxu0
        %v982 = vadd.f32 0.0, %v981
        %983 = vmatprep.mubr.f32.mxu0 0.0
        %984 = vmatmul.mubr.f32.gmra.mrb[0].mxu0 %v504
        %v985 = vpop.f32.mrb[0].mxu0
        %v986 = vadd.f32 0.0, %v985
        %v987 = vpop.f32.mrb[0].mxu0
        %v988 = vadd.f32 0.0, %v987
        %989 = vmatprep.mubr.f32.mxu0 0.0
        %990 = vmatmul.mubr.f32.gmra.mrb[0].mxu0 %v507
        %v991 = vpop.f32.mrb[0].mxu0
        %v992 = vadd.f32 0.0, %v991
        %v993 = vpop.f32.mrb[0].mxu0
        %v994 = vadd.f32 0.0, %v993
        %995 = vmatprep.mubr.f32.mxu0 0.0
        %996 = vmatmul.mubr.f32.gmra.mrb[0].mxu0 %v510
        %v997 = vpop.f32.mrb[0].mxu0
        %v998 = vadd.f32 0.0, %v997
        %v999 = vpop.f32.mrb[0].mxu0
        %v1000 = vadd.f32 0.0, %v999
        %1001 = vmatprep.mubr.f32.mxu0 0.0
        %1002 = vmatmul.mubr.f32.gmra.mrb[0].mxu0 %v513
        %v1003 = vpop.f32.mrb[0].mxu0
        %v1004 = vadd.f32 0.0, %v1003
        %v1005 = vpop.f32.mrb[0].mxu0
        %v1006 = vadd.f32 0.0, %v1005
        %1007 = vmatprep.mubr.f32.mxu0 0.0
        %1008 = vmatmul.mubr.f32.gmra.mrb[0].mxu0 %v516
        %v1009 = vpop.f32.mrb[0].mxu0
        %v1010 = vadd.f32 0.0, %v1009
        %v1011 = vpop.f32.mrb[0].mxu0
        %v1012 = vadd.f32 0.0, %v1011
        %1013 = vmatprep.mubr.f32.mxu0 0.0
        %1014 = vmatmul.mubr.f32.gmra.mrb[0].mxu0 %v519
        %v1015 = vpop.f32.mrb[0].mxu0
        %v1016 = vadd.f32 0.0, %v1015
        %v1017 = vpop.f32.mrb[0].mxu0
        %v1018 = vadd.f32 0.0, %v1017
        %1019 = vmatprep.mubr.f32.mxu0 0.0
        %1020 = vmatmul.mubr.f32.gmra.mrb[0].mxu0 %v522
        %v1021 = vpop.f32.mrb[0].mxu0
        %v1022 = vadd.f32 0.0, %v1021
        %v1023 = vpop.f32.mrb[0].mxu0
        %v1024 = vadd.f32 0.0, %v1023
        %1025 = vmatprep.mubr.f32.mxu0 0.0
        %1026 = vmatmul.mubr.f32.gmra.mrb[0].mxu0 %v525
        %v1027 = vpop.f32.mrb[0].mxu0
        %v1028 = vadd.f32 0.0, %v1027
        %v1029 = vpop.f32.mrb[0].mxu0
        %v1030 = vadd.f32 0.0, %v1029
        %1031 = vmatprep.mubr.f32.mxu0 0.0
        %1032 = vmatmul.mubr.f32.gmra.mrb[0].mxu0 %v528
        %v1033 = vpop.f32.mrb[0].mxu0
        %v1034 = vadd.f32 0.0, %v1033
        %v1035 = vpop.f32.mrb[0].mxu0
        %v1036 = vadd.f32 0.0, %v1035
        %1037 = vmatprep.mubr.f32.mxu0 0.0
        %1038 = vmatmul.mubr.f32.gmra.mrb[0].mxu0 %v531
        %v1039 = vpop.f32.mrb[0].mxu0
        %v1040 = vadd.f32 0.0, %v1039
        %v1041 = vpop.f32.mrb[0].mxu0
        %v1042 = vadd.f32 0.0, %v1041
        %1043 = vmatprep.mubr.f32.mxu0 0.0
        %1044 = vmatmul.mubr.f32.gmra.mrb[0].mxu0 %v534
        %v1045 = vpop.f32.mrb[0].mxu0
        %v1046 = vadd.f32 0.0, %v1045
        %v1047 = vpop.f32.mrb[0].mxu0
        %v1048 = vadd.f32 0.0, %v1047
        %1049 = vdwg.mxu0
        %v1051 = vlaneseq
        %v1052 = vshrl.u32 %v1051, 7
        %v1053 = vsub.s32 0, %v1052
        %v1054 = vrot.slane %v406, %v1053
        %v1055 = vlaneseq
        %v1056 = vshrl.u32 %v1055, 7
        %v1057 = vsub.s32 1, %v1056
        %v1058 = vrot.slane %v406, %v1057
        %v1059 = vlaneseq
        %v1060 = vshrl.u32 %v1059, 7
        %v1061 = vsub.s32 2, %v1060
        %v1062 = vrot.slane %v406, %v1061
        %v1063 = vlaneseq
        %v1064 = vshrl.u32 %v1063, 7
        %v1065 = vsub.s32 3, %v1064
        %v1066 = vrot.slane %v406, %v1065
        %v1071 = vsub.f32 %v1054, %v603
        %v1072 = vsub.f32 %v1058, %v605
        %v1073 = vsub.f32 %v1062, %v860
        %v1074 = vsub.f32 %v1066, %v862
        %v1075 = vsub.f32 %v1054, %v609
        %v1076 = vsub.f32 %v1058, %v611
        %v1077 = vsub.f32 %v1062, %v866
        %v1078 = vsub.f32 %v1066, %v868
        %v1079 = vsub.f32 %v1054, %v615
        %v1080 = vsub.f32 %v1058, %v617
        %v1081 = vsub.f32 %v1062, %v872
        %v1082 = vsub.f32 %v1066, %v874
        %v1083 = vsub.f32 %v1054, %v621
        %v1084 = vsub.f32 %v1058, %v623
        %v1085 = vsub.f32 %v1062, %v878
        %v1086 = vsub.f32 %v1066, %v880
        %v1087 = vsub.f32 %v1054, %v627
        %v1088 = vsub.f32 %v1058, %v629
        %v1089 = vsub.f32 %v1062, %v884
        %v1090 = vsub.f32 %v1066, %v886
        %v1091 = vsub.f32 %v1054, %v633
        %v1092 = vsub.f32 %v1058, %v635
        %v1093 = vsub.f32 %v1062, %v890
        %v1094 = vsub.f32 %v1066, %v892
        %v1095 = vsub.f32 %v1054, %v639
        %v1096 = vsub.f32 %v1058, %v641
        %v1097 = vsub.f32 %v1062, %v896
        %v1098 = vsub.f32 %v1066, %v898
        %v1099 = vsub.f32 %v1054, %v645
        %v1100 = vsub.f32 %v1058, %v647
        %v1101 = vsub.f32 %v1062, %v902
        %v1102 = vsub.f32 %v1066, %v904
        %v1103 = vsub.f32 %v1054, %v651
        %v1104 = vsub.f32 %v1058, %v653
        %v1105 = vsub.f32 %v1062, %v908
        %v1106 = vsub.f32 %v1066, %v910
        %v1107 = vsub.f32 %v1054, %v657
        %v1108 = vsub.f32 %v1058, %v659
        %v1109 = vsub.f32 %v1062, %v914
        %v1110 = vsub.f32 %v1066, %v916
        %v1111 = vsub.f32 %v1054, %v663
        %v1112 = vsub.f32 %v1058, %v665
        %v1113 = vsub.f32 %v1062, %v920
        %v1114 = vsub.f32 %v1066, %v922
        %v1115 = vsub.f32 %v1054, %v669
        %v1116 = vsub.f32 %v1058, %v671
        %v1117 = vsub.f32 %v1062, %v926
        %v1118 = vsub.f32 %v1066, %v928
        %v1119 = vsub.f32 %v1054, %v675
        %v1120 = vsub.f32 %v1058, %v677
        %v1121 = vsub.f32 %v1062, %v932
        %v1122 = vsub.f32 %v1066, %v934
        %v1123 = vsub.f32 %v1054, %v681
        %v1124 = vsub.f32 %v1058, %v683
        %v1125 = vsub.f32 %v1062, %v938
        %v1126 = vsub.f32 %v1066, %v940
        %v1127 = vsub.f32 %v1054, %v687
        %v1128 = vsub.f32 %v1058, %v689
        %v1129 = vsub.f32 %v1062, %v944
        %v1130 = vsub.f32 %v1066, %v946
        %v1131 = vsub.f32 %v1054, %v693
        %v1132 = vsub.f32 %v1058, %v695
        %v1133 = vsub.f32 %v1062, %v950
        %v1134 = vsub.f32 %v1066, %v952
        %v1135 = vsub.f32 %v1054, %v699
        %v1136 = vsub.f32 %v1058, %v701
        %v1137 = vsub.f32 %v1062, %v956
        %v1138 = vsub.f32 %v1066, %v958
        %v1139 = vsub.f32 %v1054, %v705
        %v1140 = vsub.f32 %v1058, %v707
        %v1141 = vsub.f32 %v1062, %v962
        %v1142 = vsub.f32 %v1066, %v964
        %v1143 = vsub.f32 %v1054, %v711
        %v1144 = vsub.f32 %v1058, %v713
        %v1145 = vsub.f32 %v1062, %v968
        %v1146 = vsub.f32 %v1066, %v970
        %v1147 = vsub.f32 %v1054, %v717
        %v1148 = vsub.f32 %v1058, %v719
        %v1149 = vsub.f32 %v1062, %v974
        %v1150 = vsub.f32 %v1066, %v976
        %v1151 = vsub.f32 %v1054, %v723
        %v1152 = vsub.f32 %v1058, %v725
        %v1153 = vsub.f32 %v1062, %v980
        %v1154 = vsub.f32 %v1066, %v982
        %v1155 = vsub.f32 %v1054, %v729
        %v1156 = vsub.f32 %v1058, %v731
        %v1157 = vsub.f32 %v1062, %v986
        %v1158 = vsub.f32 %v1066, %v988
        %v1159 = vsub.f32 %v1054, %v735
        %v1160 = vsub.f32 %v1058, %v737
        %v1161 = vsub.f32 %v1062, %v992
        %v1162 = vsub.f32 %v1066, %v994
        %v1163 = vsub.f32 %v1054, %v741
        %v1164 = vsub.f32 %v1058, %v743
        %v1165 = vsub.f32 %v1062, %v998
        %v1166 = vsub.f32 %v1066, %v1000
        %v1167 = vsub.f32 %v1054, %v747
        %v1168 = vsub.f32 %v1058, %v749
        %v1169 = vsub.f32 %v1062, %v1004
        %v1170 = vsub.f32 %v1066, %v1006
        %v1171 = vsub.f32 %v1054, %v753
        %v1172 = vsub.f32 %v1058, %v755
        %v1173 = vsub.f32 %v1062, %v1010
        %v1174 = vsub.f32 %v1066, %v1012
        %v1175 = vsub.f32 %v1054, %v759
        %v1176 = vsub.f32 %v1058, %v761
        %v1177 = vsub.f32 %v1062, %v1016
        %v1178 = vsub.f32 %v1066, %v1018
        %v1179 = vsub.f32 %v1054, %v765
        %v1180 = vsub.f32 %v1058, %v767
        %v1181 = vsub.f32 %v1062, %v1022
        %v1182 = vsub.f32 %v1066, %v1024
        %v1183 = vsub.f32 %v1054, %v771
        %v1184 = vsub.f32 %v1058, %v773
        %v1185 = vsub.f32 %v1062, %v1028
        %v1186 = vsub.f32 %v1066, %v1030
        %v1187 = vsub.f32 %v1054, %v777
        %v1188 = vsub.f32 %v1058, %v779
        %v1189 = vsub.f32 %v1062, %v1034
        %v1190 = vsub.f32 %v1066, %v1036
        %v1191 = vsub.f32 %v1054, %v783
        %v1192 = vsub.f32 %v1058, %v785
        %v1193 = vsub.f32 %v1062, %v1040
        %v1194 = vsub.f32 %v1066, %v1042
        %v1195 = vsub.f32 %v1054, %v789
        %v1196 = vsub.f32 %v1058, %v791
        %v1197 = vsub.f32 %v1062, %v1046
        %v1198 = vsub.f32 %v1066, %v1048
        %v1199 = vld [vmem:[#allocation2] sm:$0xff]
        %v1200 = vld [vmem:[#allocation2 + $0x8] sm:$0xff]
        %v1201 = vld [vmem:[#allocation2 + $0x10] sm:$0xff]
        %v1202 = vld [vmem:[#allocation2 + $0x18] sm:$0xff]
        %v1203 = vld [vmem:[#allocation2 + $0x20] sm:$0xff]
        %v1204 = vld [vmem:[#allocation2 + $0x28] sm:$0xff]
        %v1205 = vld [vmem:[#allocation2 + $0x30] sm:$0xff]
        %v1206 = vld [vmem:[#allocation2 + $0x38] sm:$0xff]
        %v1207 = vld [vmem:[#allocation2 + $0x40] sm:$0xff]
        %v1208 = vld [vmem:[#allocation2 + $0x48] sm:$0xff]
        %v1209 = vld [vmem:[#allocation2 + $0x50] sm:$0xff]
        %v1210 = vld [vmem:[#allocation2 + $0x58] sm:$0xff]
        %v1211 = vld [vmem:[#allocation2 + $0x60] sm:$0xff]
        %v1212 = vld [vmem:[#allocation2 + $0x68] sm:$0xff]
        %v1213 = vld [vmem:[#allocation2 + $0x70] sm:$0xff]
        %v1214 = vld [vmem:[#allocation2 + $0x78] sm:$0xff]
        %v1215 = vld [vmem:[#allocation2 + $0x80] sm:$0xff]
        %v1216 = vld [vmem:[#allocation2 + $0x88] sm:$0xff]
        %v1217 = vld [vmem:[#allocation2 + $0x90] sm:$0xff]
        %v1218 = vld [vmem:[#allocation2 + $0x98] sm:$0xff]
        %v1219 = vld [vmem:[#allocation2 + $0xa0] sm:$0xff]
        %v1220 = vld [vmem:[#allocation2 + $0xa8] sm:$0xff]
        %v1221 = vld [vmem:[#allocation2 + $0xb0] sm:$0xff]
        %v1222 = vld [vmem:[#allocation2 + $0xb8] sm:$0xff]
        %v1223 = vld [vmem:[#allocation2 + $0xc0] sm:$0xff]
        %v1224 = vld [vmem:[#allocation2 + $0xc8] sm:$0xff]
        %v1225 = vld [vmem:[#allocation2 + $0xd0] sm:$0xff]
        %v1226 = vld [vmem:[#allocation2 + $0xd8] sm:$0xff]
        %v1227 = vld [vmem:[#allocation2 + $0xe0] sm:$0xff]
        %v1228 = vld [vmem:[#allocation2 + $0xe8] sm:$0xff]
        %v1229 = vld [vmem:[#allocation2 + $0xf0] sm:$0xff]
        %v1230 = vld [vmem:[#allocation2 + $0xf8] sm:$0xff]
        %v1231 = vmin.f32 %v1199, %v1071
        %v1232 = vmin.f32 %v1200, %v1075
        %v1233 = vmin.f32 %v1201, %v1079
        %v1234 = vmin.f32 %v1202, %v1083
        %v1235 = vmin.f32 %v1203, %v1087
        %v1236 = vmin.f32 %v1204, %v1091
        %v1237 = vmin.f32 %v1205, %v1095
        %v1238 = vmin.f32 %v1206, %v1099
        %v1239 = vmin.f32 %v1207, %v1103
        %v1240 = vmin.f32 %v1208, %v1107
        %v1241 = vmin.f32 %v1209, %v1111
        %v1242 = vmin.f32 %v1210, %v1115
        %v1243 = vmin.f32 %v1211, %v1119
        %v1244 = vmin.f32 %v1212, %v1123
        %v1245 = vmin.f32 %v1213, %v1127
        %v1246 = vmin.f32 %v1214, %v1131
        %v1247 = vmin.f32 %v1215, %v1135
        %v1248 = vmin.f32 %v1216, %v1139
        %v1249 = vmin.f32 %v1217, %v1143
        %v1250 = vmin.f32 %v1218, %v1147
        %v1251 = vmin.f32 %v1219, %v1151
        %v1252 = vmin.f32 %v1220, %v1155
        %v1253 = vmin.f32 %v1221, %v1159
        %v1254 = vmin.f32 %v1222, %v1163
        %v1255 = vmin.f32 %v1223, %v1167
        %v1256 = vmin.f32 %v1224, %v1171
        %v1257 = vmin.f32 %v1225, %v1175
        %v1258 = vmin.f32 %v1226, %v1179
        %v1259 = vmin.f32 %v1227, %v1183
        %v1260 = vmin.f32 %v1228, %v1187
        %v1261 = vmin.f32 %v1229, %v1191
        %v1262 = vmin.f32 %v1230, %v1195
        %v1263 = vmin.f32 %v1231, %v1072
        %v1264 = vmin.f32 %v1232, %v1076
        %v1265 = vmin.f32 %v1233, %v1080
        %v1266 = vmin.f32 %v1234, %v1084
        %v1267 = vmin.f32 %v1235, %v1088
        %v1268 = vmin.f32 %v1236, %v1092
        %v1269 = vmin.f32 %v1237, %v1096
        %v1270 = vmin.f32 %v1238, %v1100
        %v1271 = vmin.f32 %v1239, %v1104
        %v1272 = vmin.f32 %v1240, %v1108
        %v1273 = vmin.f32 %v1241, %v1112
        %v1274 = vmin.f32 %v1242, %v1116
        %v1275 = vmin.f32 %v1243, %v1120
        %v1276 = vmin.f32 %v1244, %v1124
        %v1277 = vmin.f32 %v1245, %v1128
        %v1278 = vmin.f32 %v1246, %v1132
        %v1279 = vmin.f32 %v1247, %v1136
        %v1280 = vmin.f32 %v1248, %v1140
        %v1281 = vmin.f32 %v1249, %v1144
        %v1282 = vmin.f32 %v1250, %v1148
        %v1283 = vmin.f32 %v1251, %v1152
        %v1284 = vmin.f32 %v1252, %v1156
        %v1285 = vmin.f32 %v1253, %v1160
        %v1286 = vmin.f32 %v1254, %v1164
        %v1287 = vmin.f32 %v1255, %v1168
        %v1288 = vmin.f32 %v1256, %v1172
        %v1289 = vmin.f32 %v1257, %v1176
        %v1290 = vmin.f32 %v1258, %v1180
        %v1291 = vmin.f32 %v1259, %v1184
        %v1292 = vmin.f32 %v1260, %v1188
        %v1293 = vmin.f32 %v1261, %v1192
        %v1294 = vmin.f32 %v1262, %v1196
        %v1295 = vmin.f32 %v1263, %v1073
        %v1296 = vmin.f32 %v1264, %v1077
        %v1297 = vmin.f32 %v1265, %v1081
        %v1298 = vmin.f32 %v1266, %v1085
        %v1299 = vmin.f32 %v1267, %v1089
        %v1300 = vmin.f32 %v1268, %v1093
        %v1301 = vmin.f32 %v1269, %v1097
        %v1302 = vmin.f32 %v1270, %v1101
        %v1303 = vmin.f32 %v1271, %v1105
        %v1304 = vmin.f32 %v1272, %v1109
        %v1305 = vmin.f32 %v1273, %v1113
        %v1306 = vmin.f32 %v1274, %v1117
        %v1307 = vmin.f32 %v1275, %v1121
        %v1308 = vmin.f32 %v1276, %v1125
        %v1309 = vmin.f32 %v1277, %v1129
        %v1310 = vmin.f32 %v1278, %v1133
        %v1311 = vmin.f32 %v1279, %v1137
        %v1312 = vmin.f32 %v1280, %v1141
        %v1313 = vmin.f32 %v1281, %v1145
        %v1314 = vmin.f32 %v1282, %v1149
        %v1315 = vmin.f32 %v1283, %v1153
        %v1316 = vmin.f32 %v1284, %v1157
        %v1317 = vmin.f32 %v1285, %v1161
        %v1318 = vmin.f32 %v1286, %v1165
        %v1319 = vmin.f32 %v1287, %v1169
        %v1320 = vmin.f32 %v1288, %v1173
        %v1321 = vmin.f32 %v1289, %v1177
        %v1322 = vmin.f32 %v1290, %v1181
        %v1323 = vmin.f32 %v1291, %v1185
        %v1324 = vmin.f32 %v1292, %v1189
        %v1325 = vmin.f32 %v1293, %v1193
        %v1326 = vmin.f32 %v1294, %v1197
        %v1327 = vmin.f32 %v1295, %v1074
        %v1328 = vmin.f32 %v1296, %v1078
        %v1329 = vmin.f32 %v1297, %v1082
        %v1330 = vmin.f32 %v1298, %v1086
        %v1331 = vmin.f32 %v1299, %v1090
        %v1332 = vmin.f32 %v1300, %v1094
        %v1333 = vmin.f32 %v1301, %v1098
        %v1334 = vmin.f32 %v1302, %v1102
        %v1335 = vmin.f32 %v1303, %v1106
        %v1336 = vmin.f32 %v1304, %v1110
        %v1337 = vmin.f32 %v1305, %v1114
        %v1338 = vmin.f32 %v1306, %v1118
        %v1339 = vmin.f32 %v1307, %v1122
        %v1340 = vmin.f32 %v1308, %v1126
        %v1341 = vmin.f32 %v1309, %v1130
        %v1342 = vmin.f32 %v1310, %v1134
        %v1343 = vmin.f32 %v1311, %v1138
        %v1344 = vmin.f32 %v1312, %v1142
        %v1345 = vmin.f32 %v1313, %v1146
        %v1346 = vmin.f32 %v1314, %v1150
        %v1347 = vmin.f32 %v1315, %v1154
        %v1348 = vmin.f32 %v1316, %v1158
        %v1349 = vmin.f32 %v1317, %v1162
        %v1350 = vmin.f32 %v1318, %v1166
        %v1351 = vmin.f32 %v1319, %v1170
        %v1352 = vmin.f32 %v1320, %v1174
        %v1353 = vmin.f32 %v1321, %v1178
        %v1354 = vmin.f32 %v1322, %v1182
        %v1355 = vmin.f32 %v1323, %v1186
        %v1356 = vmin.f32 %v1324, %v1190
        %v1357 = vmin.f32 %v1325, %v1194
        %v1358 = vmin.f32 %v1326, %v1198
        %1359 = vst [vmem:[#allocation2] sm:$0xff] %v1327
        %1360 = vst [vmem:[#allocation2 + $0x8] sm:$0xff] %v1328
        %1361 = vst [vmem:[#allocation2 + $0x10] sm:$0xff] %v1329
        %1362 = vst [vmem:[#allocation2 + $0x18] sm:$0xff] %v1330
        %1363 = vst [vmem:[#allocation2 + $0x20] sm:$0xff] %v1331
        %1364 = vst [vmem:[#allocation2 + $0x28] sm:$0xff] %v1332
        %1365 = vst [vmem:[#allocation2 + $0x30] sm:$0xff] %v1333
        %1366 = vst [vmem:[#allocation2 + $0x38] sm:$0xff] %v1334
        %1367 = vst [vmem:[#allocation2 + $0x40] sm:$0xff] %v1335
        %1368 = vst [vmem:[#allocation2 + $0x48] sm:$0xff] %v1336
        %1369 = vst [vmem:[#allocation2 + $0x50] sm:$0xff] %v1337
        %1370 = vst [vmem:[#allocation2 + $0x58] sm:$0xff] %v1338
        %1371 = vst [vmem:[#allocation2 + $0x60] sm:$0xff] %v1339
        %1372 = vst [vmem:[#allocation2 + $0x68] sm:$0xff] %v1340
        %1373 = vst [vmem:[#allocation2 + $0x70] sm:$0xff] %v1341
        %1374 = vst [vmem:[#allocation2 + $0x78] sm:$0xff] %v1342
        %1375 = vst [vmem:[#allocation2 + $0x80] sm:$0xff] %v1343
        %1376 = vst [vmem:[#allocation2 + $0x88] sm:$0xff] %v1344
        %1377 = vst [vmem:[#allocation2 + $0x90] sm:$0xff] %v1345
        %1378 = vst [vmem:[#allocation2 + $0x98] sm:$0xff] %v1346
        %1379 = vst [vmem:[#allocation2 + $0xa0] sm:$0xff] %v1347
        %1380 = vst [vmem:[#allocation2 + $0xa8] sm:$0xff] %v1348
        %1381 = vst [vmem:[#allocation2 + $0xb0] sm:$0xff] %v1349
        %1382 = vst [vmem:[#allocation2 + $0xb8] sm:$0xff] %v1350
        %1383 = vst [vmem:[#allocation2 + $0xc0] sm:$0xff] %v1351
        %1384 = vst [vmem:[#allocation2 + $0xc8] sm:$0xff] %v1352
        %1385 = vst [vmem:[#allocation2 + $0xd0] sm:$0xff] %v1353
        %1386 = vst [vmem:[#allocation2 + $0xd8] sm:$0xff] %v1354
        %1387 = vst [vmem:[#allocation2 + $0xe0] sm:$0xff] %v1355
        %1388 = vst [vmem:[#allocation2 + $0xe8] sm:$0xff] %v1356
        %1389 = vst [vmem:[#allocation2 + $0xf0] sm:$0xff] %v1357
        %1390 = vst [vmem:[#allocation2 + $0xf8] sm:$0xff] %v1358
      $region45: #{region_dice_loss.1} parent=39 // loop_footer
        %s393 = sadd.s32 %s391, 1
      $region46: #{region_dice_loss.1} parent=39 // loop_footer_branch
        %390 = sbr.rel target = $region42
      $region47: #{region_dice_loss.1} parent=39 // loop_exit
        _
      %v1391 = vld [vmem:[#allocation2] sm:$0xff]
      %v1392 = vld [vmem:[#allocation2 + $0x8] sm:$0xff]
      %v1393 = vld [vmem:[#allocation2 + $0x10] sm:$0xff]
      %v1394 = vld [vmem:[#allocation2 + $0x18] sm:$0xff]
      %v1395 = vld [vmem:[#allocation2 + $0x20] sm:$0xff]
      %v1396 = vld [vmem:[#allocation2 + $0x28] sm:$0xff]
      %v1397 = vld [vmem:[#allocation2 + $0x30] sm:$0xff]
      %v1398 = vld [vmem:[#allocation2 + $0x38] sm:$0xff]
      %v1399 = vld [vmem:[#allocation2 + $0x40] sm:$0xff]
      %v1400 = vld [vmem:[#allocation2 + $0x48] sm:$0xff]
      %v1401 = vld [vmem:[#allocation2 + $0x50] sm:$0xff]
      %v1402 = vld [vmem:[#allocation2 + $0x58] sm:$0xff]
      %v1403 = vld [vmem:[#allocation2 + $0x60] sm:$0xff]
      %v1404 = vld [vmem:[#allocation2 + $0x68] sm:$0xff]
      %v1405 = vld [vmem:[#allocation2 + $0x70] sm:$0xff]
      %v1406 = vld [vmem:[#allocation2 + $0x78] sm:$0xff]
      %v1407 = vld [vmem:[#allocation2 + $0x80] sm:$0xff]
      %v1408 = vld [vmem:[#allocation2 + $0x88] sm:$0xff]
      %v1409 = vld [vmem:[#allocation2 + $0x90] sm:$0xff]
      %v1410 = vld [vmem:[#allocation2 + $0x98] sm:$0xff]
      %v1411 = vld [vmem:[#allocation2 + $0xa0] sm:$0xff]
      %v1412 = vld [vmem:[#allocation2 + $0xa8] sm:$0xff]
      %v1413 = vld [vmem:[#allocation2 + $0xb0] sm:$0xff]
      %v1414 = vld [vmem:[#allocation2 + $0xb8] sm:$0xff]
      %v1415 = vld [vmem:[#allocation2 + $0xc0] sm:$0xff]
      %v1416 = vld [vmem:[#allocation2 + $0xc8] sm:$0xff]
      %v1417 = vld [vmem:[#allocation2 + $0xd0] sm:$0xff]
      %v1418 = vld [vmem:[#allocation2 + $0xd8] sm:$0xff]
      %v1419 = vld [vmem:[#allocation2 + $0xe0] sm:$0xff]
      %v1420 = vld [vmem:[#allocation2 + $0xe8] sm:$0xff]
      %v1421 = vld [vmem:[#allocation2 + $0xf0] sm:$0xff]
      %v1422 = vld [vmem:[#allocation2 + $0xf8] sm:$0xff]
      %1423 = vmin.xlane.f32.xlu0 %v1391
      %v1424 = vpop.xlane.xlu0 %1423
      %1425 = vmin.xlane.f32.xlu0 %v1392
      %v1426 = vpop.xlane.xlu0 %1425
      %1427 = vmin.xlane.f32.xlu0 %v1393
      %v1428 = vpop.xlane.xlu0 %1427
      %1429 = vmin.xlane.f32.xlu0 %v1394
      %v1430 = vpop.xlane.xlu0 %1429
      %1431 = vmin.xlane.f32.xlu0 %v1395
      %v1432 = vpop.xlane.xlu0 %1431
      %1433 = vmin.xlane.f32.xlu0 %v1396
      %v1434 = vpop.xlane.xlu0 %1433
      %1435 = vmin.xlane.f32.xlu0 %v1397
      %v1436 = vpop.xlane.xlu0 %1435
      %1437 = vmin.xlane.f32.xlu0 %v1398
      %v1438 = vpop.xlane.xlu0 %1437
      %1439 = vmin.xlane.f32.xlu0 %v1399
      %v1440 = vpop.xlane.xlu0 %1439
      %1441 = vmin.xlane.f32.xlu0 %v1400
      %v1442 = vpop.xlane.xlu0 %1441
      %1443 = vmin.xlane.f32.xlu0 %v1401
      %v1444 = vpop.xlane.xlu0 %1443
      %1445 = vmin.xlane.f32.xlu0 %v1402
      %v1446 = vpop.xlane.xlu0 %1445
      %1447 = vmin.xlane.f32.xlu0 %v1403
      %v1448 = vpop.xlane.xlu0 %1447
      %1449 = vmin.xlane.f32.xlu0 %v1404
      %v1450 = vpop.xlane.xlu0 %1449
      %1451 = vmin.xlane.f32.xlu0 %v1405
      %v1452 = vpop.xlane.xlu0 %1451
      %1453 = vmin.xlane.f32.xlu0 %v1406
      %v1454 = vpop.xlane.xlu0 %1453
      %1455 = vmin.xlane.f32.xlu0 %v1407
      %v1456 = vpop.xlane.xlu0 %1455
      %1457 = vmin.xlane.f32.xlu0 %v1408
      %v1458 = vpop.xlane.xlu0 %1457
      %1459 = vmin.xlane.f32.xlu0 %v1409
      %v1460 = vpop.xlane.xlu0 %1459
      %1461 = vmin.xlane.f32.xlu0 %v1410
      %v1462 = vpop.xlane.xlu0 %1461
      %1463 = vmin.xlane.f32.xlu0 %v1411
      %v1464 = vpop.xlane.xlu0 %1463
      %1465 = vmin.xlane.f32.xlu0 %v1412
      %v1466 = vpop.xlane.xlu0 %1465
      %1467 = vmin.xlane.f32.xlu0 %v1413
      %v1468 = vpop.xlane.xlu0 %1467
      %1469 = vmin.xlane.f32.xlu0 %v1414
      %v1470 = vpop.xlane.xlu0 %1469
      %1471 = vmin.xlane.f32.xlu0 %v1415
      %v1472 = vpop.xlane.xlu0 %1471
      %1473 = vmin.xlane.f32.xlu0 %v1416
      %v1474 = vpop.xlane.xlu0 %1473
      %1475 = vmin.xlane.f32.xlu0 %v1417
      %v1476 = vpop.xlane.xlu0 %1475
      %1477 = vmin.xlane.f32.xlu0 %v1418
      %v1478 = vpop.xlane.xlu0 %1477
      %1479 = vmin.xlane.f32.xlu0 %v1419
      %v1480 = vpop.xlane.xlu0 %1479
      %1481 = vmin.xlane.f32.xlu0 %v1420
      %v1482 = vpop.xlane.xlu0 %1481
      %1483 = vmin.xlane.f32.xlu0 %v1421
      %v1484 = vpop.xlane.xlu0 %1483
      %1485 = vmin.xlane.f32.xlu0 %v1422
      %v1486 = vpop.xlane.xlu0 %1485
      %v1487 = vcvt.f32.s32.to.zero.pseudo %v1424
      %v1488 = vcvt.f32.s32.to.zero.pseudo %v1426
      %v1489 = vcvt.f32.s32.to.zero.pseudo %v1428
      %v1490 = vcvt.f32.s32.to.zero.pseudo %v1430
      %v1491 = vcvt.f32.s32.to.zero.pseudo %v1432
      %v1492 = vcvt.f32.s32.to.zero.pseudo %v1434
      %v1493 = vcvt.f32.s32.to.zero.pseudo %v1436
      %v1494 = vcvt.f32.s32.to.zero.pseudo %v1438
      %v1495 = vcvt.f32.s32.to.zero.pseudo %v1440
      %v1496 = vcvt.f32.s32.to.zero.pseudo %v1442
      %v1497 = vcvt.f32.s32.to.zero.pseudo %v1444
      %v1498 = vcvt.f32.s32.to.zero.pseudo %v1446
      %v1499 = vcvt.f32.s32.to.zero.pseudo %v1448
      %v1500 = vcvt.f32.s32.to.zero.pseudo %v1450
      %v1501 = vcvt.f32.s32.to.zero.pseudo %v1452
      %v1502 = vcvt.f32.s32.to.zero.pseudo %v1454
      %v1503 = vcvt.f32.s32.to.zero.pseudo %v1456
      %v1504 = vcvt.f32.s32.to.zero.pseudo %v1458
      %v1505 = vcvt.f32.s32.to.zero.pseudo %v1460
      %v1506 = vcvt.f32.s32.to.zero.pseudo %v1462
      %v1507 = vcvt.f32.s32.to.zero.pseudo %v1464
      %v1508 = vcvt.f32.s32.to.zero.pseudo %v1466
      %v1509 = vcvt.f32.s32.to.zero.pseudo %v1468
      %v1510 = vcvt.f32.s32.to.zero.pseudo %v1470
      %v1511 = vcvt.f32.s32.to.zero.pseudo %v1472
      %v1512 = vcvt.f32.s32.to.zero.pseudo %v1474
      %v1513 = vcvt.f32.s32.to.zero.pseudo %v1476
      %v1514 = vcvt.f32.s32.to.zero.pseudo %v1478
      %v1515 = vcvt.f32.s32.to.zero.pseudo %v1480
      %v1516 = vcvt.f32.s32.to.zero.pseudo %v1482
      %v1517 = vcvt.f32.s32.to.zero.pseudo %v1484
      %v1518 = vcvt.f32.s32.to.zero.pseudo %v1486
      %v1519 = vand.u32 %v1487, 255
      %v1520 = vand.u32 %v1488, 255
      %v1521 = vand.u32 %v1489, 255
      %v1522 = vand.u32 %v1490, 255
      %v1523 = vand.u32 %v1491, 255
      %v1524 = vand.u32 %v1492, 255
      %v1525 = vand.u32 %v1493, 255
      %v1526 = vand.u32 %v1494, 255
      %v1527 = vand.u32 %v1495, 255
      %v1528 = vand.u32 %v1496, 255
      %v1529 = vand.u32 %v1497, 255
      %v1530 = vand.u32 %v1498, 255
      %v1531 = vand.u32 %v1499, 255
      %v1532 = vand.u32 %v1500, 255
      %v1533 = vand.u32 %v1501, 255
      %v1534 = vand.u32 %v1502, 255
      %v1535 = vand.u32 %v1503, 255
      %v1536 = vand.u32 %v1504, 255
      %v1537 = vand.u32 %v1505, 255
      %v1538 = vand.u32 %v1506, 255
      %v1539 = vand.u32 %v1507, 255
      %v1540 = vand.u32 %v1508, 255
      %v1541 = vand.u32 %v1509, 255
      %v1542 = vand.u32 %v1510, 255
      %v1543 = vand.u32 %v1511, 255
      %v1544 = vand.u32 %v1512, 255
      %v1545 = vand.u32 %v1513, 255
      %v1546 = vand.u32 %v1514, 255
      %v1547 = vand.u32 %v1515, 255
      %v1548 = vand.u32 %v1516, 255
      %v1549 = vand.u32 %v1517, 255
      %v1550 = vand.u32 %v1518, 255
      %v1551 = vlaneseq
      %v1552 = vand.u32 %v1551, 127
      %v1553 = vadd.s32 %v1552, 1
      %vm1554 = vcmp.eq.s32.totalorder %v1519, %v1553
      %vm1555 = vcmp.eq.s32.totalorder %v1520, %v1553
      %vm1556 = vcmp.eq.s32.totalorder %v1521, %v1553
      %vm1557 = vcmp.eq.s32.totalorder %v1522, %v1553
      %vm1558 = vcmp.eq.s32.totalorder %v1523, %v1553
      %vm1559 = vcmp.eq.s32.totalorder %v1524, %v1553
      %vm1560 = vcmp.eq.s32.totalorder %v1525, %v1553
      %vm1561 = vcmp.eq.s32.totalorder %v1526, %v1553
      %vm1562 = vcmp.eq.s32.totalorder %v1527, %v1553
      %vm1563 = vcmp.eq.s32.totalorder %v1528, %v1553
      %vm1564 = vcmp.eq.s32.totalorder %v1529, %v1553
      %vm1565 = vcmp.eq.s32.totalorder %v1530, %v1553
      %vm1566 = vcmp.eq.s32.totalorder %v1531, %v1553
      %vm1567 = vcmp.eq.s32.totalorder %v1532, %v1553
      %vm1568 = vcmp.eq.s32.totalorder %v1533, %v1553
      %vm1569 = vcmp.eq.s32.totalorder %v1534, %v1553
      %vm1570 = vcmp.eq.s32.totalorder %v1535, %v1553
      %vm1571 = vcmp.eq.s32.totalorder %v1536, %v1553
      %vm1572 = vcmp.eq.s32.totalorder %v1537, %v1553
      %vm1573 = vcmp.eq.s32.totalorder %v1538, %v1553
      %vm1574 = vcmp.eq.s32.totalorder %v1539, %v1553
      %vm1575 = vcmp.eq.s32.totalorder %v1540, %v1553
      %vm1576 = vcmp.eq.s32.totalorder %v1541, %v1553
      %vm1577 = vcmp.eq.s32.totalorder %v1542, %v1553
      %vm1578 = vcmp.eq.s32.totalorder %v1543, %v1553
      %vm1579 = vcmp.eq.s32.totalorder %v1544, %v1553
      %vm1580 = vcmp.eq.s32.totalorder %v1545, %v1553
      %vm1581 = vcmp.eq.s32.totalorder %v1546, %v1553
      %vm1582 = vcmp.eq.s32.totalorder %v1547, %v1553
      %vm1583 = vcmp.eq.s32.totalorder %v1548, %v1553
      %vm1584 = vcmp.eq.s32.totalorder %v1549, %v1553
      %vm1585 = vcmp.eq.s32.totalorder %v1550, %v1553
      %v1586 = vsel %vm1554, 1, 0
      %v1587 = vsel %vm1555, 1, 0
      %v1588 = vsel %vm1556, 1, 0
      %v1589 = vsel %vm1557, 1, 0
      %v1590 = vsel %vm1558, 1, 0
      %v1591 = vsel %vm1559, 1, 0
      %v1592 = vsel %vm1560, 1, 0
      %v1593 = vsel %vm1561, 1, 0
      %v1594 = vsel %vm1562, 1, 0
      %v1595 = vsel %vm1563, 1, 0
      %v1596 = vsel %vm1564, 1, 0
      %v1597 = vsel %vm1565, 1, 0
      %v1598 = vsel %vm1566, 1, 0
      %v1599 = vsel %vm1567, 1, 0
      %v1600 = vsel %vm1568, 1, 0
      %v1601 = vsel %vm1569, 1, 0
      %v1602 = vsel %vm1570, 1, 0
      %v1603 = vsel %vm1571, 1, 0
      %v1604 = vsel %vm1572, 1, 0
      %v1605 = vsel %vm1573, 1, 0
      %v1606 = vsel %vm1574, 1, 0
      %v1607 = vsel %vm1575, 1, 0
      %v1608 = vsel %vm1576, 1, 0
      %v1609 = vsel %vm1577, 1, 0
      %v1610 = vsel %vm1578, 1, 0
      %v1611 = vsel %vm1579, 1, 0
      %v1612 = vsel %vm1580, 1, 0
      %v1613 = vsel %vm1581, 1, 0
      %v1614 = vsel %vm1582, 1, 0
      %v1615 = vsel %vm1583, 1, 0
      %v1616 = vsel %vm1584, 1, 0
      %v1617 = vsel %vm1585, 1, 0
      %v1618 = vcvt.s32.f32 %v1586
      %v1619 = vcvt.s32.f32 %v1587
      %v1620 = vcvt.s32.f32 %v1588
      %v1621 = vcvt.s32.f32 %v1589
      %v1622 = vcvt.s32.f32 %v1590
      %v1623 = vcvt.s32.f32 %v1591
      %v1624 = vcvt.s32.f32 %v1592
      %v1625 = vcvt.s32.f32 %v1593
      %v1626 = vcvt.s32.f32 %v1594
      %v1627 = vcvt.s32.f32 %v1595
      %v1628 = vcvt.s32.f32 %v1596
      %v1629 = vcvt.s32.f32 %v1597
      %v1630 = vcvt.s32.f32 %v1598
      %v1631 = vcvt.s32.f32 %v1599
      %v1632 = vcvt.s32.f32 %v1600
      %v1633 = vcvt.s32.f32 %v1601
      %v1634 = vcvt.s32.f32 %v1602
      %v1635 = vcvt.s32.f32 %v1603
      %v1636 = vcvt.s32.f32 %v1604
      %v1637 = vcvt.s32.f32 %v1605
      %v1638 = vcvt.s32.f32 %v1606
      %v1639 = vcvt.s32.f32 %v1607
      %v1640 = vcvt.s32.f32 %v1608
      %v1641 = vcvt.s32.f32 %v1609
      %v1642 = vcvt.s32.f32 %v1610
      %v1643 = vcvt.s32.f32 %v1611
      %v1644 = vcvt.s32.f32 %v1612
      %v1645 = vcvt.s32.f32 %v1613
      %v1646 = vcvt.s32.f32 %v1614
      %v1647 = vcvt.s32.f32 %v1615
      %v1648 = vcvt.s32.f32 %v1616
      %v1649 = vcvt.s32.f32 %v1617
      %v1650 = vld [vmem:[%s323] sm:$0x3]
      %v1651 = vxor.u32 %v1650, 2147483648
      %v1652 = vmul.f32 %v1651, 1.442695
      %v1653 = vpow.pop %v1652
      %v1654 = vadd.f32 %v1653, 1.0
      %v1655 = vrcp.pop %v1654
      %v1656 = vmul.f32 1.0, %v1655
      %v1657 = vld [vmem:[%s332] sm:$0x3]
      %v1658 = vmul.f32 %v1656, %v1657
      %v1660 = vlaneseq
      %v1661 = vshrl.u32 %v1660, 7
      %v1662 = vsub.s32 0, %v1661
      %v1663 = vrot.slane %v1658, %v1662
      %v1664 = vlaneseq
      %v1665 = vshrl.u32 %v1664, 7
      %v1666 = vsub.s32 1, %v1665
      %v1667 = vrot.slane %v1658, %v1666
      %v1671 = vlaneseq
      %v1672 = vshrl.u32 %v1671, 7
      %v1673 = vsub.s32 0, %v1672
      %v1674 = vrot.slane %v1656, %v1673
      %v1675 = vlaneseq
      %v1676 = vshrl.u32 %v1675, 7
      %v1677 = vsub.s32 1, %v1676
      %v1678 = vrot.slane %v1656, %v1677
      %v1682 = vlaneseq
      %v1683 = vshrl.u32 %v1682, 7
      %v1684 = vsub.s32 0, %v1683
      %v1685 = vrot.slane %v1657, %v1684
      %v1686 = vlaneseq
      %v1687 = vshrl.u32 %v1686, 7
      %v1688 = vsub.s32 1, %v1687
      %v1689 = vrot.slane %v1657, %v1688
      %vm1692 = vcmask 1040384
      %v1693 = vsel %vm1692, %v1663, %v1674
      %v1694 = vsel %vm1692, %v1667, %v1678
      %vm1695 = vcmask 1041408
      %v1696 = vsel %vm1695, %v1693, %v1685
      %v1697 = vsel %vm1695, %v1694, %v1689
      %1698 = vmatprep.subr.mxu0 0.0
      %1699 = vmatpush1.msra.mxu0 %v1618
      %1700 = vmatprep.subr.mxu0 0.0
      %1701 = vmatpush1.msra.mxu0 %v1619
      %1702 = vmatprep.subr.mxu0 0.0
      %1703 = vmatpush1.msra.mxu0 %v1620
      %1704 = vmatprep.subr.mxu0 0.0
      %1705 = vmatpush1.msra.mxu0 %v1621
      %1706 = vmatprep.subr.mxu0 0.0
      %1707 = vmatpush1.msra.mxu0 %v1622
      %1708 = vmatprep.subr.mxu0 0.0
      %1709 = vmatpush1.msra.mxu0 %v1623
      %1710 = vmatprep.subr.mxu0 0.0
      %1711 = vmatpush1.msra.mxu0 %v1624
      %1712 = vmatprep.subr.mxu0 0.0
      %1713 = vmatpush1.msra.mxu0 %v1625
      %1714 = vmatprep.subr.mxu0 0.0
      %1715 = vmatpush1.msra.mxu0 %v1626
      %1716 = vmatprep.subr.mxu0 0.0
      %1717 = vmatpush1.msra.mxu0 %v1627
      %1718 = vmatprep.subr.mxu0 0.0
      %1719 = vmatpush1.msra.mxu0 %v1628
      %1720 = vmatprep.subr.mxu0 0.0
      %1721 = vmatpush1.msra.mxu0 %v1629
      %1722 = vmatprep.subr.mxu0 0.0
      %1723 = vmatpush1.msra.mxu0 %v1630
      %1724 = vmatprep.subr.mxu0 0.0
      %1725 = vmatpush1.msra.mxu0 %v1631
      %1726 = vmatprep.subr.mxu0 0.0
      %1727 = vmatpush1.msra.mxu0 %v1632
      %1728 = vmatprep.subr.mxu0 0.0
      %1729 = vmatpush1.msra.mxu0 %v1633
      %1730 = vmatprep.subr.mxu0 0.0
      %1731 = vmatpush1.msra.mxu0 %v1634
      %1732 = vmatprep.subr.mxu0 0.0
      %1733 = vmatpush1.msra.mxu0 %v1635
      %1734 = vmatprep.subr.mxu0 0.0
      %1735 = vmatpush1.msra.mxu0 %v1636
      %1736 = vmatprep.subr.mxu0 0.0
      %1737 = vmatpush1.msra.mxu0 %v1637
      %1738 = vmatprep.subr.mxu0 0.0
      %1739 = vmatpush1.msra.mxu0 %v1638
      %1740 = vmatprep.subr.mxu0 0.0
      %1741 = vmatpush1.msra.mxu0 %v1639
      %1742 = vmatprep.subr.mxu0 0.0
      %1743 = vmatpush1.msra.mxu0 %v1640
      %1744 = vmatprep.subr.mxu0 0.0
      %1745 = vmatpush1.msra.mxu0 %v1641
      %1746 = vmatprep.subr.mxu0 0.0
      %1747 = vmatpush1.msra.mxu0 %v1642
      %1748 = vmatprep.subr.mxu0 0.0
      %1749 = vmatpush1.msra.mxu0 %v1643
      %1750 = vmatprep.subr.mxu0 0.0
      %1751 = vmatpush1.msra.mxu0 %v1644
      %1752 = vmatprep.subr.mxu0 0.0
      %1753 = vmatpush1.msra.mxu0 %v1645
      %1754 = vmatprep.subr.mxu0 0.0
      %1755 = vmatpush1.msra.mxu0 %v1646
      %1756 = vmatprep.subr.mxu0 0.0
      %1757 = vmatpush1.msra.mxu0 %v1647
      %1758 = vmatprep.subr.mxu0 0.0
      %1759 = vmatpush1.msra.mxu0 %v1648
      %1760 = vmatprep.subr.mxu0 0.0
      %1761 = vmatpush1.msra.mxu0 %v1649
      %1762 = vmatprep.mubr.f32.mxu0 %v1697
      %1763 = vmatmul.mubr.f32.gmra.mrb[0].mxu0 %v1696
      %v1764 = vpop.f32.mrb[0].mxu0
      %v1765 = vadd.f32 0.0, %v1764
      %v1766 = vpop.f32.mrb[0].mxu0
      %1767 = vdwg.mxu0
      %1768 = vst [vmem:[%s356] sm:$0x7] %v1765
      %p1769 = scmp.lt.s32.totalorder %s27, 1
      %s1770 = scalar_select %p1769, %s27, 1
      %p1771 = scmp.lt.s32.totalorder %s28, 1
      %s1772 = scalar_select %p1771, %s28, 1
      %s1773 = smul.addr %s1770, 2
      %s1774 = sadd.s32 %s1772, %s1773
      %s1775 = smul.addr %s1774, 4
      %s1776 = scalar_lea.vmem %s6, %s1775
      // Predicated region
      $region48: #{region_dice_loss.1} parent=39 // pred_check
        %p1777 = pneg %p189
      $region49: #{region_dice_loss.1} parent=39 // pred_check_branch
        %1779 = sbr.rel (%p1777) target = $region51
      $region50: #{region_dice_loss.1} parent=39 // pred_region
        _
      $region51: #{region_dice_loss.1} parent=39 // pred_fallthru
        _
    $region40: #{region_dice_loss.1} parent=5 // pred_fallthru
      _
    %p1780 = scmp.le.s32.totalorder 2, %s18
    // Predicated region
    $region52: #{region_dice_loss.1} parent=5 // pred_check
      %p1781 = pneg %p1780
    $region53: #{region_dice_loss.1} parent=5 // pred_check_branch
      %1783 = sbr.rel (%p1781) target = $region55
    $region54: #{region_dice_loss.1} parent=5 // pred_region
      %s1784 = ssub.s32 %s18, 2
      // Predicated region
      $region56: #{region_dice_loss.1} parent=54 // pred_check
        %p1785 = pneg %p195
      $region57: #{region_dice_loss.1} parent=54 // pred_check_branch
        %1787 = sbr.rel (%p1785) target = $region59
      $region58: #{region_dice_loss.1} parent=54 // pred_region
        %p1788 = scmp.lt.s32.totalorder %s29, 1
        %s1789 = scalar_select %p1788, %s29, 1
        %p1790 = scmp.lt.s32.totalorder %s30, 1
        %s1791 = scalar_select %p1790, %s30, 1
        %s1792 = smul.addr %s1789, 2
        %s1793 = sadd.s32 %s1791, %s1792
        %s1794 = smul.addr %s1793, 4
        %s1795 = scalar_lea.vmem %s6, %s1794
      $region59: #{region_dice_loss.1} parent=54 // pred_fallthru
        _
    $region55: #{region_dice_loss.1} parent=5 // pred_fallthru
      _
  $region6: #{region_dice_loss.1} parent=0 // loop_footer
    %s22 = sadd.s32 1, %s18
  $region7: #{region_dice_loss.1} parent=0 // loop_footer_branch
    %17 = sbr.rel target = $region3
  $region8: #{region_dice_loss.1} parent=0 // loop_exit
    _

</llo_original>
